<compile_context>
chip_gen: v7x
topology: tpu7x:2x2x1
jax: 0.10.0
libtpu: 0.0.40
codegen_flags: <defaults>
</compile_context>

<pallas_src>
import functools
import numpy as np

import jax
import jax.numpy as jnp
from jax.experimental import pallas as pl
from jax.experimental.pallas import tpu as pltpu

_IN_EPS = 1e-5


def _round_up(x, m):
    return (x + m - 1) // m * m


def _cdiv(a, b):
    return (a + b - 1) // b


# ---------------- Pallas kernel 1: fused "same" Conv1d (channels-last) ----------------------
# One grid step (b, i, j) computes a (TL, TN) output tile of one batch element:
#   out[l, n] = sum_k act(x_slab[i*TL + l + k, :]) @ W[k][:, n] + bias[n] (+ReLU) (+residual)
# x_slab is the whole (zero "same"-padded) per-batch activation, resident in VMEM across the
# L and N tiles; the k-shifts are static in-register slices of one aligned window load.
def _conv1d_cl_kernel(x_ref, w_ref, b_ref, *rest, TL, KS, WIN, L_valid,
                      pre_relu, relu, add_residual):
    if add_residual:
        res_ref, o_ref = rest
    else:
        (o_ref,) = rest

    i = pl.program_id(1)
    base = pl.multiple_of(i * TL, 8)

    xs = x_ref[0, pl.ds(base, WIN), :]                 # (WIN, Cin) aligned window, bf16
    if pre_relu:                                       # relu1 fused into the A load
        xs = jnp.maximum(xs, 0)

    acc = None
    for k in range(KS):                                # unrolled kernel-size accumulation
        xk = xs[k:k + TL, :]
        d = jnp.dot(xk, w_ref[k], preferred_element_type=jnp.float32)
        acc = d if acc is None else acc + d

    r = acc + b_ref[...]                               # bias (f32)
    if relu:                                           # relu2 fused (non-norm path)
        r = jnp.maximum(r, 0.0)

    # zero rows beyond the true sequence length so L-padding never leaks downstream
    rows = base + jax.lax.broadcasted_iota(jnp.int32, (TL, 1), 0)
    r = jnp.where(rows < L_valid, r, 0.0)

    if add_residual:                                   # residual add fused into conv2
        r = r + res_ref[0].astype(jnp.float32)

    o_ref[0] = r.astype(o_ref.dtype)


def conv1d_same_cl(x_slab, w_t, bias_p, *, L, TL, Lp, relu, pre_relu,
                   residual=None, out_dtype=jnp.bfloat16):
    """Fused "same" conv (stride=1) in channels-last layout.

    x_slab: (B, Lslab, Cin) bf16, real rows at [pad_left, pad_left+L), zeros elsewhere.
    w_t:    (K, Cin, Cout_p) bf16  (already dense / block-diagonal for groups).
    bias_p: (Cout_p,) f32.
    residual: optional (B, Lp, Cout_p) f32 added in the epilogue.
    returns (B, Lp, Cout_p) in out_dtype.
    """
    B, Lslab, Cin = x_slab.shape
    KS, Cin_w, Cout_p = w_t.shape
    assert Cin_w == Cin and Lp % TL == 0
    WIN = TL + _round_up(KS - 1, 8)
    assert Lslab >= (Lp - TL) + WIN
    nL = Lp // TL
    TN = Cout_p if Cout_p <= 256 else (256 if Cout_p % 256 == 0 else 128)
    nN = Cout_p // TN

    in_specs = [
        pl.BlockSpec((1, Lslab, Cin), lambda b, i, j: (b, 0, 0)),   # slab resident per batch
        pl.BlockSpec((KS, Cin, TN), lambda b, i, j: (0, 0, j)),     # weights resident
        pl.BlockSpec((1, TN), lambda b, i, j: (0, j)),
    ]
    args = [x_slab, w_t, bias_p.reshape(1, Cout_p)]
    if residual is not None:
        in_specs.append(pl.BlockSpec((1, TL, TN), lambda b, i, j: (b, i, j)))
        args.append(residual)

    return pl.pallas_call(
        functools.partial(_conv1d_cl_kernel, TL=TL, KS=KS, WIN=WIN, L_valid=L,
                          pre_relu=pre_relu, relu=relu,
                          add_residual=residual is not None),
        out_shape=jax.ShapeDtypeStruct((B, Lp, Cout_p), out_dtype),
        grid=(B, nL, nN),
        in_specs=in_specs,
        out_specs=pl.BlockSpec((1, TL, TN), lambda b, i, j: (b, i, j)),
        compiler_params=pltpu.CompilerParams(
            dimension_semantics=("parallel", "parallel", "parallel")),
    )(*args)


# ---------------- Pallas kernel 2: InstanceNorm1d (affine=False) in channels-last ------------
def _inorm_cl_kernel(x_ref, o_ref, *, L_valid, relu):
    x = x_ref[0].astype(jnp.float32)                       # (Lb, C)
    rows = jax.lax.broadcasted_iota(jnp.int32, (x.shape[0], 1), 0)
    valid = rows < L_valid
    xv = jnp.where(valid, x, 0.0)
    mean = jnp.sum(xv, axis=0, keepdims=True) * (1.0 / L_valid)
    d = jnp.where(valid, x - mean, 0.0)                    # two-pass: centered before squaring
    var = jnp.sum(d * d, axis=0, keepdims=True) * (1.0 / L_valid)
    y = d * jax.lax.rsqrt(var + _IN_EPS)                   # padded rows stay exactly zero
    if relu:
        y = jnp.maximum(y, 0.0)
    o_ref[0] = y.astype(o_ref.dtype)


def instance_norm1d_cl(x_cl, *, L, relu, out_dtype=jnp.bfloat16):
    """nn.InstanceNorm1d (affine=False, eps=1e-5) on channels-last (B, Lb, C); stats over
    rows [0, L); optional fused ReLU; rows >= L are written as zeros."""
    B, Lb, C = x_cl.shape
    return pl.pallas_call(
        functools.partial(_inorm_cl_kernel, L_valid=L, relu=relu),
        out_shape=jax.ShapeDtypeStruct((B, Lb, C), out_dtype),
        grid=(B,),
        in_specs=[pl.BlockSpec((1, Lb, C), lambda b: (b, 0, 0))],
        out_specs=pl.BlockSpec((1, Lb, C), lambda b: (b, 0, 0)),
        compiler_params=pltpu.CompilerParams(dimension_semantics=("parallel",)),
    )(x_cl)


# ---------------- ResidualBlock1d forward ----------------------------------------------------
def residual_block1d_forward(params, x, *, kernel_size, groups=1, use_norm=False,
                             use_do=False, is_first_block=False):
    """ResidualBlock1d.forward (eval mode). x: (B, Cin, L) f32 -> (B, Cout, L) f32."""
    del use_do  # Dropout layers are identities in eval mode.
    B, Cin, L = x.shape
    w1, b1 = params['conv1']['w'], params['conv1']['b']
    w2, b2 = params['conv2']['w'], params['conv2']['b']
    Cout = w1.shape[0]
    KS = kernel_size
    assert w1.shape[2] == KS and w2.shape[0] == Cout and w2.shape[2] == KS

    # Conv1dPad forces stride=1 -> "same" padding
    p = max(0, KS - 1)
    pad_l = p // 2

    Cout_p = _round_up(Cout, 128)               # lane-dense channels kept through the block
    nL = _cdiv(L, 512)                          # big L tiles (HBM roofline), 16-aligned (bf16)
    TL = _round_up(_cdiv(L, nL), 16)
    Lp = nL * TL
    halo = _round_up(KS - 1, 8)
    Lslab = Lp + halo

    def dense_weight(w, cin_p):
        """torch (Cout, Cin/groups, K) -> dense bf16 (K, cin_p, Cout_p); block-diagonal over
        groups so one kernel covers groups>1 (extra MXU lanes are free in this HBM-bound
        regime)."""
        cout, cin_g, k = w.shape
        wt = jnp.transpose(w, (2, 1, 0))                                   # (K, Cin_g, Cout)
        if groups == 1:
            dense, cin = wt, cin_g
        else:
            cin = cin_g * groups
            cout_g = cout // groups
            dense = jnp.zeros((k, cin, cout), w.dtype)
            for g in range(groups):
                dense = dense.at[:, g * cin_g:(g + 1) * cin_g,
                                 g * cout_g:(g + 1) * cout_g].set(
                    wt[:, :, g * cout_g:(g + 1) * cout_g])
        dense = jnp.pad(dense, ((0, 0), (0, cin_p - cin), (0, Cout_p - cout)))
        return dense.astype(jnp.bfloat16)

    x_cl = jnp.transpose(x, (0, 2, 1))                    # (B, L, Cin) channels-last, once

    # ---- conv1 input slab ------------------------------------------------------------------
    if (not is_first_block) and use_norm:
        h = instance_norm1d_cl(x_cl, L=L, relu=True)      # norm1 + relu1 fused
        pre_relu1 = False
    else:
        h = x_cl.astype(jnp.bfloat16)
        pre_relu1 = not is_first_block                    # relu1 fused into conv1's A load
    slab1 = jnp.pad(h, ((0, 0), (pad_l, Lslab - pad_l - L), (0, 0)))

    w1d = dense_weight(w1, Cin)
    b1p = jnp.pad(b1.astype(jnp.float32), (0, Cout_p - Cout))
    # conv1 (+bias); relu2 fused into the epilogue when there is no norm2 in between
    y1 = conv1d_same_cl(slab1, w1d, b1p, L=L, TL=TL, Lp=Lp,
                        relu=not use_norm, pre_relu=pre_relu1,
                        residual=None, out_dtype=jnp.bfloat16)        # (B, Lp, Cout_p) bf16

    if use_norm:
        y1 = instance_norm1d_cl(y1, L=L, relu=True)       # norm2 + relu2 fused

    # ---- conv2 (+bias) with the residual add fused into the epilogue ------------------------
    slab2 = jnp.pad(y1, ((0, 0), (pad_l, Lslab - pad_l - Lp), (0, 0)))
    ch1 = (Cout - Cin) // 2 if Cout != Cin else 0
    identity = jnp.pad(x_cl, ((0, 0), (0, Lp - L), (ch1, Cout_p - Cin - ch1)))
    w2d = dense_weight(w2, Cout_p)
    b2p = jnp.pad(b2.astype(jnp.float32), (0, Cout_p - Cout))
    y2 = conv1d_same_cl(slab2, w2d, b2p, L=L, TL=TL, Lp=Lp,
                        relu=False, pre_relu=False,
                        residual=identity, out_dtype=jnp.float32)     # (B, Lp, Cout_p) f32

    return jnp.transpose(y2, (0, 2, 1))[:, :Cout, :L]     # back to (B, Cout, L), single slice


# ---------------- pure-JAX reference (for correctness check) ---------------------------------
def _ref_conv1d_same(x, w, b, groups=1):
    K = w.shape[-1]
    p = max(0, K - 1)
    xp = jnp.pad(x, ((0, 0), (0, 0), (p // 2, p - p // 2)))
    out = jax.lax.conv_general_dilated(xp, w, window_strides=(1,), padding='VALID',
                                       dimension_numbers=('NCH', 'OIH', 'NCH'),
                                       feature_group_count=groups)
    return out + b[None, :, None]


def _ref_inorm1d(x):
    mean = jnp.mean(x, axis=2, keepdims=True)
    var = jnp.mean((x - mean) ** 2, axis=2, keepdims=True)
    return (x - mean) * jax.lax.rsqrt(var + _IN_EPS)


def residual_block1d_ref(params, x, *, groups, use_norm, is_first_block):
    identity = x
    out = x
    if not is_first_block:
        if use_norm:
            out = _ref_inorm1d(out)
        out = jnp.maximum(out, 0.0)
    out = _ref_conv1d_same(out, params['conv1']['w'], params['conv1']['b'], groups)
    if use_norm:
        out = _ref_inorm1d(out)
    out = jnp.maximum(out, 0.0)
    out = _ref_conv1d_same(out, params['conv2']['w'], params['conv2']['b'], groups)
    Cin, Cout = x.shape[1], out.shape[1]
    if Cout != Cin:
        ch1 = (Cout - Cin) // 2
        identity = jnp.pad(identity, ((0, 0), (ch1, Cout - Cin - ch1), (0, 0)))
    return out + identity


# ---------------- demo ------------------------------------------------------------------------
if __name__ == "__main__":
    key = jax.random.PRNGKey(0)
    B, Cin, Cout, K, L = 4, 32, 64, 3, 50        # L not a multiple of 16 -> exercises masking

    def conv1d_p(rng, cout, cin_g, k):
        bound = 1.0 / np.sqrt(cin_g * k)
        kw, kb = jax.random.split(rng)
        return {'w': jax.random.uniform(kw, (cout, cin_g, k), jnp.float32, -bound, bound),
                'b': jax.random.uniform(kb, (cout,), jnp.float32, -bound, bound)}

    kx, kp = jax.random.split(key)
    x = jax.random.normal(kx, (B, Cin, L), jnp.float32)

    # PipsUS v8 uses use_norm=False, groups=1; also exercise the norm and grouped paths.
    for use_norm, groups in ((False, 1), (True, 1), (False, 2)):
        kw1, kw2 = jax.random.split(jax.random.fold_in(kp, 10 * int(use_norm) + groups))
        params = {'conv1': conv1d_p(kw1, Cout, Cin // groups, K),
                  'conv2': conv1d_p(kw2, Cout, Cout // groups, K)}
        fwd = jax.jit(functools.partial(
            residual_block1d_forward, kernel_size=K, groups=groups,
            use_norm=use_norm, use_do=False, is_first_block=False))
        out = fwd(params, x)
        jax.block_until_ready(out)
        assert out.shape == (B, Cout, L)
        ref = residual_block1d_ref(params, x, groups=groups, use_norm=use_norm,
                                   is_first_block=False)
        np.testing.assert_allclose(np.asarray(out), np.asarray(ref), rtol=5e-2, atol=5e-2)

    print("KERNEL_OK")
</pallas_src>

<mosaic_0001>
module attributes {stable_mosaic.version = 11 : i64} {
  func.func @_conv1d_cl_kernel(%arg0: i32, %arg1: i32, %arg2: i32, %arg3: memref<1x72x32xbf16, #tpu.memory_space<vmem>>, %arg4: memref<3x32x128xbf16, #tpu.memory_space<vmem>>, %arg5: memref<1x128xf32, #tpu.memory_space<vmem>>, %arg6: memref<1x64x128xbf16, #tpu.memory_space<vmem>>) attributes {dimension_semantics = [#tpu.dimension_semantics<parallel>, #tpu.dimension_semantics<parallel>, #tpu.dimension_semantics<parallel>], iteration_bounds = array<i64: 4, 1, 1>, scalar_prefetch = 0 : i64, scratch_operands = 0 : i64, tpu.core_type = #tpu.core_type<tc>, window_params = [{transform_indices = @transform_0, window_bounds = array<i64: 1, 72, 32>}, {transform_indices = @transform_1, window_bounds = array<i64: 3, 32, 128>}, {transform_indices = @transform_2, window_bounds = array<i64: 1, 128>}, {transform_indices = @transform_3, window_bounds = array<i64: 1, 64, 128>}]} {
    %c64_i32 = arith.constant 64 : i32
    %0 = arith.muli %arg1, %c64_i32 : i32
    %1 = tpu.assume_multiple %0, 8 : i32
    %c0 = arith.constant 0 : index
    %2 = arith.index_cast %1 : i32 to index
    %c0_0 = arith.constant 0 : index
    %3 = vector.load %arg3[%c0, %2, %c0_0] : memref<1x72x32xbf16, #tpu.memory_space<vmem>>, vector<1x72x32xbf16>
    %4 = vector.shape_cast %3 : vector<1x72x32xbf16> to vector<72x32xbf16>
    %cst = arith.constant 0.000000e+00 : bf16
    %5 = vector.broadcast %cst : bf16 to vector<72x32xbf16>
    %6 = arith.maximumf %4, %5 : vector<72x32xbf16>
    %7 = vector.extract_strided_slice %6 {offsets = [0, 0], sizes = [64, 32], strides = [1, 1]} : vector<72x32xbf16> to vector<64x32xbf16>
    %c0_1 = arith.constant 0 : index
    %c0_2 = arith.constant 0 : index
    %c0_3 = arith.constant 0 : index
    %8 = vector.load %arg4[%c0_1, %c0_2, %c0_3] : memref<3x32x128xbf16, #tpu.memory_space<vmem>>, vector<1x32x128xbf16>
    %9 = vector.shape_cast %8 : vector<1x32x128xbf16> to vector<32x128xbf16>
    %cst_4 = arith.constant dense<0.000000e+00> : vector<64x128xf32>
    %10 = tpu.matmul %7, %9, %cst_4 {dimension_numbers = #tpu.dot_dimension_numbers<[1], [0], [0], [1], [0, 0, 1, 1], [], []>} : vector<64x32xbf16>, vector<32x128xbf16>, vector<64x128xf32> -> vector<64x128xf32>
    %11 = vector.extract_strided_slice %6 {offsets = [1, 0], sizes = [64, 32], strides = [1, 1]} : vector<72x32xbf16> to vector<64x32xbf16>
    %c1 = arith.constant 1 : index
    %c0_5 = arith.constant 0 : index
    %c0_6 = arith.constant 0 : index
    %12 = vector.load %arg4[%c1, %c0_5, %c0_6] : memref<3x32x128xbf16, #tpu.memory_space<vmem>>, vector<1x32x128xbf16>
    %13 = vector.shape_cast %12 : vector<1x32x128xbf16> to vector<32x128xbf16>
    %cst_7 = arith.constant dense<0.000000e+00> : vector<64x128xf32>
    %14 = tpu.matmul %11, %13, %cst_7 {dimension_numbers = #tpu.dot_dimension_numbers<[1], [0], [0], [1], [0, 0, 1, 1], [], []>} : vector<64x32xbf16>, vector<32x128xbf16>, vector<64x128xf32> -> vector<64x128xf32>
    %15 = arith.addf %10, %14 : vector<64x128xf32>
    %16 = vector.extract_strided_slice %6 {offsets = [2, 0], sizes = [64, 32], strides = [1, 1]} : vector<72x32xbf16> to vector<64x32xbf16>
    %c2 = arith.constant 2 : index
    %c0_8 = arith.constant 0 : index
    %c0_9 = arith.constant 0 : index
    %17 = vector.load %arg4[%c2, %c0_8, %c0_9] : memref<3x32x128xbf16, #tpu.memory_space<vmem>>, vector<1x32x128xbf16>
    %18 = vector.shape_cast %17 : vector<1x32x128xbf16> to vector<32x128xbf16>
    %cst_10 = arith.constant dense<0.000000e+00> : vector<64x128xf32>
    %19 = tpu.matmul %16, %18, %cst_10 {dimension_numbers = #tpu.dot_dimension_numbers<[1], [0], [0], [1], [0, 0, 1, 1], [], []>} : vector<64x32xbf16>, vector<32x128xbf16>, vector<64x128xf32> -> vector<64x128xf32>
    %20 = arith.addf %15, %19 : vector<64x128xf32>
    %c0_11 = arith.constant 0 : index
    %c0_12 = arith.constant 0 : index
    %21 = vector.load %arg5[%c0_11, %c0_12] : memref<1x128xf32, #tpu.memory_space<vmem>>, vector<1x128xf32>
    %22 = vector.broadcast %21 : vector<1x128xf32> to vector<64x128xf32>
    %23 = arith.addf %20, %22 : vector<64x128xf32>
    %cst_13 = arith.constant 0.000000e+00 : f32
    %24 = vector.broadcast %cst_13 : f32 to vector<64x128xf32>
    %25 = arith.maximumf %23, %24 : vector<64x128xf32>
    %26 = tpu.iota {dimensions = array<i32: 0>} : vector<64x1xi32>
    %27 = vector.broadcast %1 : i32 to vector<64x1xi32>
    %28 = arith.addi %27, %26 : vector<64x1xi32>
    %c50_i32 = arith.constant 50 : i32
    %29 = vector.broadcast %c50_i32 : i32 to vector<64x1xi32>
    %30 = arith.cmpi slt, %28, %29 : vector<64x1xi32>
    %cst_14 = arith.constant 0.000000e+00 : f32
    %31 = vector.shape_cast %30 : vector<64x1xi1> to vector<64x1xi1>
    %32 = vector.broadcast %31 : vector<64x1xi1> to vector<64x128xi1>
    %33 = vector.broadcast %cst_14 : f32 to vector<64x128xf32>
    %34 = arith.select %32, %25, %33 : vector<64x128xi1>, vector<64x128xf32>
    %35 = arith.truncf %34 : vector<64x128xf32> to vector<64x128xbf16>
    %c0_15 = arith.constant 0 : index
    %c0_16 = arith.constant 0 : index
    %c0_17 = arith.constant 0 : index
    %36 = vector.load %arg6[%c0_15, %c0_16, %c0_17] : memref<1x64x128xbf16, #tpu.memory_space<vmem>>, vector<1x64x128xbf16>
    %37 = vector.shape_cast %36 : vector<1x64x128xbf16> to vector<64x128xbf16>
    %38 = vector.shape_cast %35 : vector<64x128xbf16> to vector<1x64x128xbf16>
    tpu.vector_store %arg6[%c0_15, %c0_16, %c0_17], %38 {strides = array<i32>} : memref<1x64x128xbf16, #tpu.memory_space<vmem>>, vector<1x64x128xbf16>,
    return
  }
  func.func @transform_0(%arg0: i32, %arg1: i32, %arg2: i32) -> (i32, i32, i32) {
    %c0_i32 = arith.constant 0 : i32
    %c0_i32_0 = arith.constant 0 : i32
    %c0_i32_1 = arith.constant 0 : i32
    return %arg0, %c0_i32, %c0_i32_0 : i32, i32, i32
  }
  func.func @transform_1(%arg0: i32, %arg1: i32, %arg2: i32) -> (i32, i32, i32) {
    %c0_i32 = arith.constant 0 : i32
    %c0_i32_0 = arith.constant 0 : i32
    %c0_i32_1 = arith.constant 0 : i32
    return %c0_i32, %c0_i32_0, %arg2 : i32, i32, i32
  }
  func.func @transform_2(%arg0: i32, %arg1: i32, %arg2: i32) -> (i32, i32) {
    %c0_i32 = arith.constant 0 : i32
    %c0_i32_0 = arith.constant 0 : i32
    return %c0_i32, %arg2 : i32, i32
  }
  func.func @transform_3(%arg0: i32, %arg1: i32, %arg2: i32) -> (i32, i32, i32) {
    %c0_i32 = arith.constant 0 : i32
    return %arg0, %arg1, %arg2 : i32, i32, i32
  }
}

module attributes {stable_mosaic.version = 11 : i64} {
  func.func @_conv1d_cl_kernel(%arg0: i32, %arg1: i32, %arg2: i32, %arg3: memref<1x72x128xbf16, #tpu.memory_space<vmem>>, %arg4: memref<3x128x128xbf16, #tpu.memory_space<vmem>>, %arg5: memref<1x128xf32, #tpu.memory_space<vmem>>, %arg6: memref<1x64x128xf32, #tpu.memory_space<vmem>>, %arg7: memref<1x64x128xf32, #tpu.memory_space<vmem>>) attributes {dimension_semantics = [#tpu.dimension_semantics<parallel>, #tpu.dimension_semantics<parallel>, #tpu.dimension_semantics<parallel>], iteration_bounds = array<i64: 4, 1, 1>, scalar_prefetch = 0 : i64, scratch_operands = 0 : i64, tpu.core_type = #tpu.core_type<tc>, window_params = [{transform_indices = @transform_0, window_bounds = array<i64: 1, 72, 128>}, {transform_indices = @transform_1, window_bounds = array<i64: 3, 128, 128>}, {transform_indices = @transform_2, window_bounds = array<i64: 1, 128>}, {transform_indices = @transform_3, window_bounds = array<i64: 1, 64, 128>}, {transform_indices = @transform_4, window_bounds = array<i64: 1, 64, 128>}]} {
    %c64_i32 = arith.constant 64 : i32
    %0 = arith.muli %arg1, %c64_i32 : i32
    %1 = tpu.assume_multiple %0, 8 : i32
    %c0 = arith.constant 0 : index
    %2 = arith.index_cast %1 : i32 to index
    %c0_0 = arith.constant 0 : index
    %3 = vector.load %arg3[%c0, %2, %c0_0] : memref<1x72x128xbf16, #tpu.memory_space<vmem>>, vector<1x72x128xbf16>
    %4 = vector.shape_cast %3 : vector<1x72x128xbf16> to vector<72x128xbf16>
    %5 = vector.extract_strided_slice %4 {offsets = [0, 0], sizes = [64, 128], strides = [1, 1]} : vector<72x128xbf16> to vector<64x128xbf16>
    %c0_1 = arith.constant 0 : index
    %c0_2 = arith.constant 0 : index
    %c0_3 = arith.constant 0 : index
    %6 = vector.load %arg4[%c0_1, %c0_2, %c0_3] : memref<3x128x128xbf16, #tpu.memory_space<vmem>>, vector<1x128x128xbf16>
    %7 = vector.shape_cast %6 : vector<1x128x128xbf16> to vector<128x128xbf16>
    %cst = arith.constant dense<0.000000e+00> : vector<64x128xf32>
    %8 = tpu.matmul %5, %7, %cst {dimension_numbers = #tpu.dot_dimension_numbers<[1], [0], [0], [1], [0, 0, 1, 1], [], []>} : vector<64x128xbf16>, vector<128x128xbf16>, vector<64x128xf32> -> vector<64x128xf32>
    %9 = vector.extract_strided_slice %4 {offsets = [1, 0], sizes = [64, 128], strides = [1, 1]} : vector<72x128xbf16> to vector<64x128xbf16>
    %c1 = arith.constant 1 : index
    %c0_4 = arith.constant 0 : index
    %c0_5 = arith.constant 0 : index
    %10 = vector.load %arg4[%c1, %c0_4, %c0_5] : memref<3x128x128xbf16, #tpu.memory_space<vmem>>, vector<1x128x128xbf16>
    %11 = vector.shape_cast %10 : vector<1x128x128xbf16> to vector<128x128xbf16>
    %cst_6 = arith.constant dense<0.000000e+00> : vector<64x128xf32>
    %12 = tpu.matmul %9, %11, %cst_6 {dimension_numbers = #tpu.dot_dimension_numbers<[1], [0], [0], [1], [0, 0, 1, 1], [], []>} : vector<64x128xbf16>, vector<128x128xbf16>, vector<64x128xf32> -> vector<64x128xf32>
    %13 = arith.addf %8, %12 : vector<64x128xf32>
    %14 = vector.extract_strided_slice %4 {offsets = [2, 0], sizes = [64, 128], strides = [1, 1]} : vector<72x128xbf16> to vector<64x128xbf16>
    %c2 = arith.constant 2 : index
    %c0_7 = arith.constant 0 : index
    %c0_8 = arith.constant 0 : index
    %15 = vector.load %arg4[%c2, %c0_7, %c0_8] : memref<3x128x128xbf16, #tpu.memory_space<vmem>>, vector<1x128x128xbf16>
    %16 = vector.shape_cast %15 : vector<1x128x128xbf16> to vector<128x128xbf16>
    %cst_9 = arith.constant dense<0.000000e+00> : vector<64x128xf32>
    %17 = tpu.matmul %14, %16, %cst_9 {dimension_numbers = #tpu.dot_dimension_numbers<[1], [0], [0], [1], [0, 0, 1, 1], [], []>} : vector<64x128xbf16>, vector<128x128xbf16>, vector<64x128xf32> -> vector<64x128xf32>
    %18 = arith.addf %13, %17 : vector<64x128xf32>
    %c0_10 = arith.constant 0 : index
    %c0_11 = arith.constant 0 : index
    %19 = vector.load %arg5[%c0_10, %c0_11] : memref<1x128xf32, #tpu.memory_space<vmem>>, vector<1x128xf32>
    %20 = vector.broadcast %19 : vector<1x128xf32> to vector<64x128xf32>
    %21 = arith.addf %18, %20 : vector<64x128xf32>
    %22 = tpu.iota {dimensions = array<i32: 0>} : vector<64x1xi32>
    %23 = vector.broadcast %1 : i32 to vector<64x1xi32>
    %24 = arith.addi %23, %22 : vector<64x1xi32>
    %c50_i32 = arith.constant 50 : i32
    %25 = vector.broadcast %c50_i32 : i32 to vector<64x1xi32>
    %26 = arith.cmpi slt, %24, %25 : vector<64x1xi32>
    %cst_12 = arith.constant 0.000000e+00 : f32
    %27 = vector.shape_cast %26 : vector<64x1xi1> to vector<64x1xi1>
    %28 = vector.broadcast %27 : vector<64x1xi1> to vector<64x128xi1>
    %29 = vector.broadcast %cst_12 : f32 to vector<64x128xf32>
    %30 = arith.select %28, %21, %29 : vector<64x128xi1>, vector<64x128xf32>
    %c0_13 = arith.constant 0 : index
    %c0_14 = arith.constant 0 : index
    %c0_15 = arith.constant 0 : index
    %31 = vector.load %arg6[%c0_13, %c0_14, %c0_15] : memref<1x64x128xf32, #tpu.memory_space<vmem>>, vector<1x64x128xf32>
    %32 = vector.shape_cast %31 : vector<1x64x128xf32> to vector<64x128xf32>
    %33 = arith.addf %30, %32 : vector<64x128xf32>
    %c0_16 = arith.constant 0 : index
    %c0_17 = arith.constant 0 : index
    %c0_18 = arith.constant 0 : index
    %34 = vector.load %arg7[%c0_16, %c0_17, %c0_18] : memref<1x64x128xf32, #tpu.memory_space<vmem>>, vector<1x64x128xf32>
    %35 = vector.shape_cast %34 : vector<1x64x128xf32> to vector<64x128xf32>
    %36 = vector.shape_cast %33 : vector<64x128xf32> to vector<1x64x128xf32>
    tpu.vector_store %arg7[%c0_16, %c0_17, %c0_18], %36 {strides = array<i32>} : memref<1x64x128xf32, #tpu.memory_space<vmem>>, vector<1x64x128xf32>,
    return
  }
  func.func @transform_0(%arg0: i32, %arg1: i32, %arg2: i32) -> (i32, i32, i32) {
    %c0_i32 = arith.constant 0 : i32
    %c0_i32_0 = arith.constant 0 : i32
    %c0_i32_1 = arith.constant 0 : i32
    return %arg0, %c0_i32, %c0_i32_0 : i32, i32, i32
  }
  func.func @transform_1(%arg0: i32, %arg1: i32, %arg2: i32) -> (i32, i32, i32) {
    %c0_i32 = arith.constant 0 : i32
    %c0_i32_0 = arith.constant 0 : i32
    %c0_i32_1 = arith.constant 0 : i32
    return %c0_i32, %c0_i32_0, %arg2 : i32, i32, i32
  }
  func.func @transform_2(%arg0: i32, %arg1: i32, %arg2: i32) -> (i32, i32) {
    %c0_i32 = arith.constant 0 : i32
    %c0_i32_0 = arith.constant 0 : i32
    return %c0_i32, %arg2 : i32, i32
  }
  func.func @transform_3(%arg0: i32, %arg1: i32, %arg2: i32) -> (i32, i32, i32) {
    %c0_i32 = arith.constant 0 : i32
    return %arg0, %arg1, %arg2 : i32, i32, i32
  }
  func.func @transform_4(%arg0: i32, %arg1: i32, %arg2: i32) -> (i32, i32, i32) {
    %c0_i32 = arith.constant 0 : i32
    return %arg0, %arg1, %arg2 : i32, i32, i32
  }
}

</mosaic_0001>

<llo_original>
// kernel: residual_block1d_forward.2
$region0: #{residual_block1d_forward.2}
  #allocation0 [shape = 'u32[]', space=smem, size = 0x4, offset = 0x4, fixed_abs, tag = 'smem constant byte address 0x4 - core index']
  #allocation1 [shape = 'u32[144,128]{1,0:T(1,128)}', space=vmem, size = 0x12000, scoped, tag = 'internal scratch']
  %s0 = inlined_call_operand.vmem [shape: bf16[4,72,32], index: 0, kind: input, shape index: {}]
  %s1 = inlined_call_operand.vmem [shape: bf16[3,32,128], index: 1, kind: input, shape index: {}]
  %s2 = inlined_call_operand.vmem [shape: f32[1,128], index: 2, kind: input, shape index: {}]
  %s3 = inlined_call_operand.vmem [shape: bf16[4,64,128], index: 3, kind: output, shape index: {}]
  %s4 = sld [smem:[#allocation0]]
  $region45: #{residual_block1d_forward.2} parent=0
    _
  %s6 = ssub.s32 1, %s4
  %s7 = scalar_select 0, %s6, %s4
  loop: start=0, step=1, limit=6
  $region2: #{residual_block1d_forward.2} parent=0 // loop_pre_header
    _
  $region3: #{residual_block1d_forward.2} parent=0 // loop_header
    %s9 = sphi 0, %s13
    %p10 = scmp.ge.s32.totalorder %s9, 6
    %s16 = sphi 0, %s35
    %s17 = sphi 0, %s31
    %s18 = sphi 0, %s27
    %s19 = sphi 0, %s16
    %s20 = sphi 0, %s17
    %s21 = sphi 0, %s18
    %s22 = sphi 0, %s19
    %s23 = sphi 0, %s20
    %s24 = sphi 0, %s21
    %s38 = sphi 0, %s40
    %s41 = sphi 0, %s38
    %s42 = sphi 0, %s41
    %s58 = sphi 0, %s42
    %s64 = sphi 0, %s66
    %s67 = sphi 0, %s64
    %s68 = sphi 0, %s67
    %s84 = sphi 0, %s68
    %s90 = sphi 0, %s92
    %s93 = sphi 0, %s90
    %s94 = sphi 0, %s93
    %s110 = sphi 0, %s94
    %s120 = sphi 0, %s122
    %s123 = sphi 0, %s120
    %s124 = sphi 0, %s123
    %s140 = sphi 0, %s124
  $region4: #{residual_block1d_forward.2} parent=0 // loop_header_branch
    %12 = sbr.rel (%p10) target = $region8
  $region5: #{residual_block1d_forward.2} parent=0 // loop_body
    %s14 = ssub.s32 %s9, 1
    %s15 = ssub.s32 %s9, 2
    %s25 = sadd.s32 1, %s18
    %p26 = scmp.ge.s32.totalorder %s25, 1
    %s27 = scalar_select %p26, 0, %s25
    %s28 = sadd.s32 1, %s17
    %s29 = scalar_select %p26, %s28, %s17
    %p30 = scmp.ge.s32.totalorder %s29, 1
    %s31 = scalar_select %p30, 0, %s29
    %s32 = sadd.s32 1, %s16
    %s33 = scalar_select %p30, %s32, %s16
    %p34 = scmp.ge.s32.totalorder %s33, 4
    %s35 = scalar_select %p34, 0, %s33
    %s36 = ssub.s32 %s16, %s35
    %p37 = scmp.eq.s32.totalorder %s36, 0
    %s39 = sadd.s32 %s38, 1
    %s40 = scalar_select %p37, %s38, %s39
    %p43 = pneg %p37
    %p44 = scmp.eq.s32.totalorder %s9, 3
    %p45 = por %p43, %p44
    %p46 = scmp.ne.s32.totalorder %s38, %s41
    %p47 = scmp.eq.s32.totalorder %s9, 0
    %p48 = por %p46, %p47
    %p49 = scmp.ne.s32.totalorder %s38, %s41
    %p50 = scmp.eq.s32.totalorder %s14, 3
    %p51 = por %p49, %p50
    %p52 = scmp.ne.s32.totalorder %s41, %s42
    %p53 = scmp.eq.s32.totalorder %s14, 0
    %p54 = por %p52, %p53
    %p55 = scmp.ne.s32.totalorder %s41, %s42
    %p56 = scmp.eq.s32.totalorder %s15, 3
    %p57 = por %p55, %p56
    %p59 = scmp.ne.s32.totalorder %s42, %s58
    %p60 = scmp.eq.s32.totalorder %s15, 0
    %p61 = por %p59, %p60
    %s62 = ssub.s32 %s18, %s27
    %p63 = scmp.eq.s32.totalorder %s62, 0
    %s65 = sadd.s32 %s64, 1
    %s66 = scalar_select %p63, %s64, %s65
    %p69 = pneg %p63
    %p70 = scmp.eq.s32.totalorder %s9, 3
    %p71 = por %p69, %p70
    %p72 = scmp.ne.s32.totalorder %s64, %s67
    %p73 = scmp.eq.s32.totalorder %s9, 0
    %p74 = por %p72, %p73
    %p75 = scmp.ne.s32.totalorder %s64, %s67
    %p76 = scmp.eq.s32.totalorder %s14, 3
    %p77 = por %p75, %p76
    %p78 = scmp.ne.s32.totalorder %s67, %s68
    %p79 = scmp.eq.s32.totalorder %s14, 0
    %p80 = por %p78, %p79
    %p81 = scmp.ne.s32.totalorder %s67, %s68
    %p82 = scmp.eq.s32.totalorder %s15, 3
    %p83 = por %p81, %p82
    %p85 = scmp.ne.s32.totalorder %s68, %s84
    %p86 = scmp.eq.s32.totalorder %s15, 0
    %p87 = por %p85, %p86
    %s88 = ssub.s32 %s18, %s27
    %p89 = scmp.eq.s32.totalorder %s88, 0
    %s91 = sadd.s32 %s90, 1
    %s92 = scalar_select %p89, %s90, %s91
    %p95 = pneg %p89
    %p96 = scmp.eq.s32.totalorder %s9, 3
    %p97 = por %p95, %p96
    %p98 = scmp.ne.s32.totalorder %s90, %s93
    %p99 = scmp.eq.s32.totalorder %s9, 0
    %p100 = por %p98, %p99
    %p101 = scmp.ne.s32.totalorder %s90, %s93
    %p102 = scmp.eq.s32.totalorder %s14, 3
    %p103 = por %p101, %p102
    %p104 = scmp.ne.s32.totalorder %s93, %s94
    %p105 = scmp.eq.s32.totalorder %s14, 0
    %p106 = por %p104, %p105
    %p107 = scmp.ne.s32.totalorder %s93, %s94
    %p108 = scmp.eq.s32.totalorder %s15, 3
    %p109 = por %p107, %p108
    %p111 = scmp.ne.s32.totalorder %s94, %s110
    %p112 = scmp.eq.s32.totalorder %s15, 0
    %p113 = por %p111, %p112
    %s114 = ssub.s32 %s16, %s35
    %s115 = ssub.s32 %s17, %s31
    %s116 = sor.u32 %s114, %s115
    %s117 = ssub.s32 %s18, %s27
    %s118 = sor.u32 %s116, %s117
    %p119 = scmp.eq.s32.totalorder %s118, 0
    %s121 = sadd.s32 %s120, 1
    %s122 = scalar_select %p119, %s120, %s121
    %p125 = pneg %p119
    %p126 = scmp.eq.s32.totalorder %s9, 3
    %p127 = por %p125, %p126
    %p128 = scmp.ne.s32.totalorder %s120, %s123
    %p129 = scmp.eq.s32.totalorder %s9, 0
    %p130 = por %p128, %p129
    %p131 = scmp.ne.s32.totalorder %s120, %s123
    %p132 = scmp.eq.s32.totalorder %s14, 3
    %p133 = por %p131, %p132
    %p134 = scmp.ne.s32.totalorder %s123, %s124
    %p135 = scmp.eq.s32.totalorder %s14, 0
    %p136 = por %p134, %p135
    %p137 = scmp.ne.s32.totalorder %s123, %s124
    %p138 = scmp.eq.s32.totalorder %s15, 3
    %p139 = por %p137, %p138
    %p141 = scmp.ne.s32.totalorder %s124, %s140
    %p142 = scmp.eq.s32.totalorder %s15, 0
    %p143 = por %p141, %p142
    %p144 = scmp.le.s32.totalorder 1, %s9
    %p145 = scmp.lt.s32.totalorder %s9, 5
    %p146 = pnand %p144, %p145
    %p147 = pneg %p146
    // Predicated region
    $region9: #{residual_block1d_forward.2} parent=5 // pred_check
      _
    $region10: #{residual_block1d_forward.2} parent=5 // pred_check_branch
      %149 = sbr.rel (%p146) target = $region12
    $region11: #{residual_block1d_forward.2} parent=5 // pred_region
      %s150 = ssub.s32 %s9, 1
      // Predicated region
      $region13: #{residual_block1d_forward.2} parent=11 // pred_check
        %p151 = pneg %p80
      $region14: #{residual_block1d_forward.2} parent=11 // pred_check_branch
        %153 = sbr.rel (%p151) target = $region16
      $region15: #{residual_block1d_forward.2} parent=11 // pred_region
        %p154 = scmp.lt.s32.totalorder %s21, 0
        %s155 = scalar_select %p154, %s21, 0
        %s156 = smul.addr %s155, 4
        %s157 = scalar_lea.vmem %s1, %s156
      $region16: #{residual_block1d_forward.2} parent=11 // pred_fallthru
        _
      // Predicated region
      $region17: #{residual_block1d_forward.2} parent=11 // pred_check
        %p158 = pneg %p106
      $region18: #{residual_block1d_forward.2} parent=11 // pred_check_branch
        %160 = sbr.rel (%p158) target = $region20
      $region19: #{residual_block1d_forward.2} parent=11 // pred_region
        %p161 = scmp.lt.s32.totalorder %s21, 0
        %s162 = scalar_select %p161, %s21, 0
        %s163 = scalar_lea.vmem %s2, %s162
      $region20: #{residual_block1d_forward.2} parent=11 // pred_fallthru
        _
    $region12: #{residual_block1d_forward.2} parent=5 // pred_fallthru
      _
    %p164 = scmp.lt.s32.totalorder %s9, 4
    // Predicated region
    $region21: #{residual_block1d_forward.2} parent=5 // pred_check
      %p165 = pneg %p164
    $region22: #{residual_block1d_forward.2} parent=5 // pred_check_branch
      %167 = sbr.rel (%p165) target = $region24
    $region23: #{residual_block1d_forward.2} parent=5 // pred_region
      // Predicated region
      $region25: #{residual_block1d_forward.2} parent=23 // pred_check
        %p168 = pneg %p48
      $region26: #{residual_block1d_forward.2} parent=23 // pred_check_branch
        %170 = sbr.rel (%p168) target = $region28
      $region27: #{residual_block1d_forward.2} parent=23 // pred_region
        %p171 = scmp.lt.s32.totalorder %s16, 3
        %s172 = scalar_select %p171, %s16, 3
        %s173 = smul.addr %s172, 9
        %s174 = smul.addr %s173, 4
        %s175 = scalar_lea.vmem %s0, %s174
      $region28: #{residual_block1d_forward.2} parent=23 // pred_fallthru
        _
    $region24: #{residual_block1d_forward.2} parent=5 // pred_fallthru
      _
    %p176 = scmp.le.s32.totalorder 1, %s9
    %p177 = scmp.lt.s32.totalorder %s9, 5
    %p178 = pnand %p176, %p177
    %p179 = pneg %p178
    // Predicated region
    $region29: #{residual_block1d_forward.2} parent=5 // pred_check
      _
    $region30: #{residual_block1d_forward.2} parent=5 // pred_check_branch
      %181 = sbr.rel (%p178) target = $region32
    $region31: #{residual_block1d_forward.2} parent=5 // pred_region
      %s182 = ssub.s32 %s9, 1
      %p183 = scmp.lt.s32.totalorder %s19, 3
      %s184 = scalar_select %p183, %s19, 3
      %s185 = smul.addr %s184, 9
      %s186 = smul.addr %s185, 4
      %s187 = scalar_lea.vmem %s0, %s186
      %p188 = pneg %p54
      %p189 = pneg %p51
      %p190 = scmp.lt.s32.totalorder %s21, 0
      %s191 = scalar_select %p190, %s21, 0
      %s192 = smul.addr %s191, 4
      %s193 = scalar_lea.vmem %s1, %s192
      %p194 = pneg %p80
      %p195 = pneg %p77
      %p196 = scmp.lt.s32.totalorder %s21, 0
      %s197 = scalar_select %p196, %s21, 0
      %s198 = scalar_lea.vmem %s2, %s197
      %p199 = pneg %p106
      %p200 = pneg %p103
      %p201 = pneg %p136
      %p202 = pneg %p133
      %s203 = smul.u32 8, %s20
      %p204 = scmp.lt.s32.totalorder %s19, 3
      %s205 = scalar_select %p204, %s19, 3
      %p206 = scmp.lt.s32.totalorder %s203, 7
      %s207 = scalar_select %p206, %s203, 7
      %p208 = scmp.lt.s32.totalorder %s21, 0
      %s209 = scalar_select %p208, %s21, 0
      %s210 = sadd.s32 %s209, %s207
      %s211 = smul.addr %s205, 8
      %s212 = sadd.s32 %s210, %s211
      %s213 = smul.addr %s212, 4
      %s214 = scalar_lea.vmem %s3, %s213
      %p215 = scmp.lt.s32.totalorder %s19, 3
      %s216 = scalar_select %p215, %s19, 3
      %s217 = smul.addr %s216, 9
      %s218 = smul.addr %s217, 4
      %s219 = scalar_lea.vmem %s0, %s218
      %p220 = scmp.lt.s32.totalorder %s21, 0
      %s221 = scalar_select %p220, %s21, 0
      %s222 = smul.addr %s221, 4
      %s223 = scalar_lea.vmem %s1, %s222
      %p224 = scmp.lt.s32.totalorder %s21, 0
      %s225 = scalar_select %p224, %s21, 0
      %s226 = scalar_lea.vmem %s2, %s225
      %s227 = smul.u32 8, %s20
      %p228 = scmp.lt.s32.totalorder %s19, 3
      %s229 = scalar_select %p228, %s19, 3
      %p230 = scmp.lt.s32.totalorder %s227, 7
      %s231 = scalar_select %p230, %s227, 7
      %p232 = scmp.lt.s32.totalorder %s21, 0
      %s233 = scalar_select %p232, %s21, 0
      %s234 = sadd.s32 %s233, %s231
      %s235 = smul.addr %s229, 8
      %s236 = sadd.s32 %s234, %s235
      %s237 = smul.addr %s236, 4
      %s238 = scalar_lea.vmem %s3, %s237
      %s239 = smul.u32 8, %s20
      %s241 = smul.u32 %s20, 64
      %s242 = sshra.s32 %s241, 3
      %s243 = sand.u32 %s241, 7
      %s244 = smul.addr %s242, 4
      %s245 = scalar_lea.vmem %s219, %s244
      %v246 = vld [vmem:[%s245] sm:$0xf]
      %v247 = vld [vmem:[%s245 + $0x4] sm:$0xf]
      %v248 = vld [vmem:[%s245 + $0x8] sm:$0xf]
      %v249 = vld [vmem:[%s245 + $0xc] sm:$0xf]
      %v250 = vld [vmem:[%s245 + $0x10] sm:$0xf]
      %v251 = vld [vmem:[%s245 + $0x14] sm:$0xf]
      %v252 = vld [vmem:[%s245 + $0x18] sm:$0xf]
      %v253 = vld [vmem:[%s245 + $0x1c] sm:$0xf]
      %v254 = vld [vmem:[%s245 + $0x20] sm:$0xf]
      %v255 = vmax.bf16 %v246, 0
      %v256 = vmax.bf16 %v247, 0
      %v257 = vmax.bf16 %v248, 0
      %v258 = vmax.bf16 %v249, 0
      %v259 = vmax.bf16 %v250, 0
      %v260 = vmax.bf16 %v251, 0
      %v261 = vmax.bf16 %v252, 0
      %v262 = vmax.bf16 %v253, 0
      %v263 = vmax.bf16 %v254, 0
      %v264 = vld [vmem:[%s223] sm:$0xf]
      %v265 = vld [vmem:[%s223 + $0x4] sm:$0xf]
      %v266 = vld [vmem:[%s223 + $0x8] sm:$0xf]
      %v267 = vld [vmem:[%s223 + $0xc] sm:$0xf]
      %s268 = scalar_lea.vmem %s223, 16
      %v269 = vld [vmem:[%s268] sm:$0xf]
      %v270 = vld [vmem:[%s268 + $0x4] sm:$0xf]
      %v271 = vld [vmem:[%s268 + $0x8] sm:$0xf]
      %v272 = vld [vmem:[%s268 + $0xc] sm:$0xf]
      %v282 = vunpack.c.l.b16 %v255
      %v283 = vunpack.c.l.b16 %v256
      %v284 = vunpack.c.l.b16 %v257
      %v285 = vunpack.c.l.b16 %v258
      %v286 = vunpack.c.l.b16 %v259
      %v287 = vunpack.c.l.b16 %v260
      %v288 = vunpack.c.l.b16 %v261
      %v289 = vunpack.c.l.b16 %v262
      %v290 = vunpack.c.l.b16 %v263
      %v291 = vpack.c.b16 %v283, %v282
      %v292 = vpack.c.b16 %v285, %v284
      %v293 = vpack.c.b16 %v287, %v286
      %v294 = vpack.c.b16 %v289, %v288
      %v295 = vpack.c.b16 %v290, %v290
      %vm296 = vsmask.f32 7424
      %v298 = vshrl.u32 %v291, 16
      %v300 = vshll.u32 %v291, 16
      %v302 = vrot.slane %v300, 1
      %v303 = vor.u32 %v298, %v302
      %v305 = vshll.u32 %v292, 16
      %v307 = vrot.slane %v305, 1
      %v308 = vsel %vm296, %v303, %v307
      %v309 = vshrl.u32 %v292, 16
      %v311 = vor.u32 %v309, %v307
      %v313 = vshll.u32 %v293, 16
      %v315 = vrot.slane %v313, 1
      %v316 = vsel %vm296, %v311, %v315
      %v317 = vshrl.u32 %v293, 16
      %v319 = vor.u32 %v317, %v315
      %v321 = vshll.u32 %v294, 16
      %v323 = vrot.slane %v321, 1
      %v324 = vsel %vm296, %v319, %v323
      %v325 = vshrl.u32 %v294, 16
      %v327 = vor.u32 %v325, %v323
      %v329 = vshll.u32 %v295, 16
      %v331 = vrot.slane %v329, 1
      %v332 = vsel %vm296, %v327, %v331
      %v337 = vunpack.c.l.b16 %v269
      %v338 = vunpack.c.l.b16 %v270
      %v339 = vunpack.c.l.b16 %v271
      %v340 = vunpack.c.l.b16 %v272
      %v341 = vpack.c.b16 %v338, %v337
      %v342 = vpack.c.b16 %v340, %v339
      %vm345 = vcmask 261120
      %v347 = vsel %vm345, %v308, 0
      %v350 = vsel %vm345, %v316, 0
      %v353 = vsel %vm345, %v324, 0
      %v356 = vsel %vm345, %v332, 0
      %358 = vmatprep.subr.bf16.mxu0 0
      %359 = vmatpush1.bf16.msra.mxu0 %v341
      %360 = vmatprep.subr.bf16.mxu0 0
      %361 = vmatpush1.bf16.msra.mxu0 %v342
      %362 = vmatprep.subr.bf16.mxu0 0
      %363 = vmatpush1.bf16.msra.mxu0 0
      %364 = vmatprep.subr.bf16.mxu0 0
      %365 = vmatpush1.bf16.msra.mxu0 0
      %366 = vmatprep.subr.bf16.mxu0 0
      %367 = vmatpush1.bf16.msra.mxu0 0
      %368 = vmatprep.subr.bf16.mxu0 0
      %369 = vmatpush1.bf16.msra.mxu0 0
      %370 = vmatprep.subr.bf16.mxu0 0
      %371 = vmatpush1.bf16.msra.mxu0 0
      %372 = vmatprep.subr.bf16.mxu0 0
      %373 = vmatpush1.bf16.msra.mxu0 0
      %374 = vmatprep.subr.bf16.mxu0 0
      %375 = vmatpush1.bf16.msra.mxu0 0
      %376 = vmatprep.subr.bf16.mxu0 0
      %377 = vmatpush1.bf16.msra.mxu0 0
      %378 = vmatprep.subr.bf16.mxu0 0
      %379 = vmatpush1.bf16.msra.mxu0 0
      %380 = vmatprep.subr.bf16.mxu0 0
      %381 = vmatpush1.bf16.msra.mxu0 0
      %382 = vmatprep.subr.bf16.mxu0 0
      %383 = vmatpush1.bf16.msra.mxu0 0
      %384 = vmatprep.subr.bf16.mxu0 0
      %385 = vmatpush1.bf16.msra.mxu0 0
      %386 = vmatprep.subr.bf16.mxu0 0
      %387 = vmatpush1.bf16.msra.mxu0 0
      %388 = vmatprep.subr.bf16.mxu0 0
      %389 = vmatpush1.bf16.msra.mxu0 0
      %390 = vmatprep.mubr.bf16.mxu0 0
      %391 = vmatmul.mubr.bf16.gmra.mrb[0].mxu0 %v347
      %v392 = vpop.f32.mrb[0].mxu0
      %v393 = vadd.f32 0.0, %v392
      %v394 = vpop.f32.mrb[0].mxu0
      %v395 = vpop.f32.mrb[0].mxu0
      %v396 = vadd.f32 0.0, %v395
      %v397 = vpop.f32.mrb[0].mxu0
      %398 = vmatprep.mubr.bf16.mxu0 0
      %399 = vmatmul.mubr.bf16.gmra.mrb[0].mxu0 %v350
      %v400 = vpop.f32.mrb[0].mxu0
      %v401 = vadd.f32 0.0, %v400
      %v402 = vpop.f32.mrb[0].mxu0
      %v403 = vpop.f32.mrb[0].mxu0
      %v404 = vadd.f32 0.0, %v403
      %v405 = vpop.f32.mrb[0].mxu0
      %406 = vmatprep.mubr.bf16.mxu0 0
      %407 = vmatmul.mubr.bf16.gmra.mrb[0].mxu0 %v353
      %v408 = vpop.f32.mrb[0].mxu0
      %v409 = vadd.f32 0.0, %v408
      %v410 = vpop.f32.mrb[0].mxu0
      %v411 = vpop.f32.mrb[0].mxu0
      %v412 = vadd.f32 0.0, %v411
      %v413 = vpop.f32.mrb[0].mxu0
      %414 = vmatprep.mubr.bf16.mxu0 0
      %415 = vmatmul.mubr.bf16.gmra.mrb[0].mxu0 %v356
      %v416 = vpop.f32.mrb[0].mxu0
      %v417 = vadd.f32 0.0, %v416
      %v418 = vpop.f32.mrb[0].mxu0
      %v419 = vpop.f32.mrb[0].mxu0
      %v420 = vadd.f32 0.0, %v419
      %v421 = vpop.f32.mrb[0].mxu0
      %422 = vdwg.mxu0
      %v427 = vunpack.c.l.b16 %v264
      %v428 = vunpack.c.l.b16 %v265
      %v429 = vunpack.c.l.b16 %v266
      %v430 = vunpack.c.l.b16 %v267
      %v431 = vpack.c.b16 %v428, %v427
      %v432 = vpack.c.b16 %v430, %v429
      %v435 = vsel %vm345, %v291, 0
      %v437 = vsel %vm345, %v292, 0
      %v439 = vsel %vm345, %v293, 0
      %v441 = vsel %vm345, %v294, 0
      %443 = vmatprep.subr.bf16.mxu0 0
      %444 = vmatpush1.bf16.msra.mxu0 %v431
      %445 = vmatprep.subr.bf16.mxu0 0
      %446 = vmatpush1.bf16.msra.mxu0 %v432
      %447 = vmatprep.subr.bf16.mxu0 0
      %448 = vmatpush1.bf16.msra.mxu0 0
      %449 = vmatprep.subr.bf16.mxu0 0
      %450 = vmatpush1.bf16.msra.mxu0 0
      %451 = vmatprep.subr.bf16.mxu0 0
      %452 = vmatpush1.bf16.msra.mxu0 0
      %453 = vmatprep.subr.bf16.mxu0 0
      %454 = vmatpush1.bf16.msra.mxu0 0
      %455 = vmatprep.subr.bf16.mxu0 0
      %456 = vmatpush1.bf16.msra.mxu0 0
      %457 = vmatprep.subr.bf16.mxu0 0
      %458 = vmatpush1.bf16.msra.mxu0 0
      %459 = vmatprep.subr.bf16.mxu0 0
      %460 = vmatpush1.bf16.msra.mxu0 0
      %461 = vmatprep.subr.bf16.mxu0 0
      %462 = vmatpush1.bf16.msra.mxu0 0
      %463 = vmatprep.subr.bf16.mxu0 0
      %464 = vmatpush1.bf16.msra.mxu0 0
      %465 = vmatprep.subr.bf16.mxu0 0
      %466 = vmatpush1.bf16.msra.mxu0 0
      %467 = vmatprep.subr.bf16.mxu0 0
      %468 = vmatpush1.bf16.msra.mxu0 0
      %469 = vmatprep.subr.bf16.mxu0 0
      %470 = vmatpush1.bf16.msra.mxu0 0
      %471 = vmatprep.subr.bf16.mxu0 0
      %472 = vmatpush1.bf16.msra.mxu0 0
      %473 = vmatprep.subr.bf16.mxu0 0
      %474 = vmatpush1.bf16.msra.mxu0 0
      %475 = vmatprep.mubr.bf16.mxu0 0
      %476 = vmatmul.mubr.bf16.gmra.mrb[0].mxu0 %v435
      %v477 = vpop.f32.mrb[0].mxu0
      %v478 = vadd.f32 %v393, %v477
      %v479 = vpop.f32.mrb[0].mxu0
      %v480 = vpop.f32.mrb[0].mxu0
      %v481 = vadd.f32 %v396, %v480
      %v482 = vpop.f32.mrb[0].mxu0
      %483 = vmatprep.mubr.bf16.mxu0 0
      %484 = vmatmul.mubr.bf16.gmra.mrb[0].mxu0 %v437
      %v485 = vpop.f32.mrb[0].mxu0
      %v486 = vadd.f32 %v401, %v485
      %v487 = vpop.f32.mrb[0].mxu0
      %v488 = vpop.f32.mrb[0].mxu0
      %v489 = vadd.f32 %v404, %v488
      %v490 = vpop.f32.mrb[0].mxu0
      %491 = vmatprep.mubr.bf16.mxu0 0
      %492 = vmatmul.mubr.bf16.gmra.mrb[0].mxu0 %v439
      %v493 = vpop.f32.mrb[0].mxu0
      %v494 = vadd.f32 %v409, %v493
      %v495 = vpop.f32.mrb[0].mxu0
      %v496 = vpop.f32.mrb[0].mxu0
      %v497 = vadd.f32 %v412, %v496
      %v498 = vpop.f32.mrb[0].mxu0
      %499 = vmatprep.mubr.bf16.mxu0 0
      %500 = vmatmul.mubr.bf16.gmra.mrb[0].mxu0 %v441
      %v501 = vpop.f32.mrb[0].mxu0
      %v502 = vadd.f32 %v417, %v501
      %v503 = vpop.f32.mrb[0].mxu0
      %v504 = vpop.f32.mrb[0].mxu0
      %v505 = vadd.f32 %v420, %v504
      %v506 = vpop.f32.mrb[0].mxu0
      %507 = vdwg.mxu0
      %s508 = scalar_lea.vmem %s223, 32
      %v509 = vld [vmem:[%s508] sm:$0xf]
      %v510 = vld [vmem:[%s508 + $0x4] sm:$0xf]
      %v511 = vld [vmem:[%s508 + $0x8] sm:$0xf]
      %v512 = vld [vmem:[%s508 + $0xc] sm:$0xf]
      %vm513 = vcmask 1046528
      %v514 = vrot.slane %v291, 1
      %v515 = vrot.slane %v292, 1
      %v516 = vsel %vm513, %v514, %v515
      %v517 = vrot.slane %v293, 1
      %v518 = vsel %vm513, %v515, %v517
      %v519 = vrot.slane %v294, 1
      %v520 = vsel %vm513, %v517, %v519
      %v521 = vrot.slane %v295, 1
      %v522 = vsel %vm513, %v519, %v521
      %v527 = vunpack.c.l.b16 %v509
      %v528 = vunpack.c.l.b16 %v510
      %v529 = vunpack.c.l.b16 %v511
      %v530 = vunpack.c.l.b16 %v512
      %v531 = vpack.c.b16 %v528, %v527
      %v532 = vpack.c.b16 %v530, %v529
      %v536 = vsel %vm345, %v516, 0
      %v539 = vsel %vm345, %v518, 0
      %v542 = vsel %vm345, %v520, 0
      %v545 = vsel %vm345, %v522, 0
      %547 = vmatprep.subr.bf16.mxu0 0
      %548 = vmatpush1.bf16.msra.mxu0 %v531
      %549 = vmatprep.subr.bf16.mxu0 0
      %550 = vmatpush1.bf16.msra.mxu0 %v532
      %551 = vmatprep.subr.bf16.mxu0 0
      %552 = vmatpush1.bf16.msra.mxu0 0
      %553 = vmatprep.subr.bf16.mxu0 0
      %554 = vmatpush1.bf16.msra.mxu0 0
      %555 = vmatprep.subr.bf16.mxu0 0
      %556 = vmatpush1.bf16.msra.mxu0 0
      %557 = vmatprep.subr.bf16.mxu0 0
      %558 = vmatpush1.bf16.msra.mxu0 0
      %559 = vmatprep.subr.bf16.mxu0 0
      %560 = vmatpush1.bf16.msra.mxu0 0
      %561 = vmatprep.subr.bf16.mxu0 0
      %562 = vmatpush1.bf16.msra.mxu0 0
      %563 = vmatprep.subr.bf16.mxu0 0
      %564 = vmatpush1.bf16.msra.mxu0 0
      %565 = vmatprep.subr.bf16.mxu0 0
      %566 = vmatpush1.bf16.msra.mxu0 0
      %567 = vmatprep.subr.bf16.mxu0 0
      %568 = vmatpush1.bf16.msra.mxu0 0
      %569 = vmatprep.subr.bf16.mxu0 0
      %570 = vmatpush1.bf16.msra.mxu0 0
      %571 = vmatprep.subr.bf16.mxu0 0
      %572 = vmatpush1.bf16.msra.mxu0 0
      %573 = vmatprep.subr.bf16.mxu0 0
      %574 = vmatpush1.bf16.msra.mxu0 0
      %575 = vmatprep.subr.bf16.mxu0 0
      %576 = vmatpush1.bf16.msra.mxu0 0
      %577 = vmatprep.subr.bf16.mxu0 0
      %578 = vmatpush1.bf16.msra.mxu0 0
      %579 = vmatprep.mubr.bf16.mxu0 0
      %580 = vmatmul.mubr.bf16.gmra.mrb[0].mxu0 %v536
      %v581 = vpop.f32.mrb[0].mxu0
      %v582 = vadd.f32 0.0, %v581
      %v583 = vpop.f32.mrb[0].mxu0
      %v584 = vpop.f32.mrb[0].mxu0
      %v585 = vadd.f32 0.0, %v584
      %v586 = vpop.f32.mrb[0].mxu0
      %587 = vmatprep.mubr.bf16.mxu0 0
      %588 = vmatmul.mubr.bf16.gmra.mrb[0].mxu0 %v539
      %v589 = vpop.f32.mrb[0].mxu0
      %v590 = vadd.f32 0.0, %v589
      %v591 = vpop.f32.mrb[0].mxu0
      %v592 = vpop.f32.mrb[0].mxu0
      %v593 = vadd.f32 0.0, %v592
      %v594 = vpop.f32.mrb[0].mxu0
      %595 = vmatprep.mubr.bf16.mxu0 0
      %596 = vmatmul.mubr.bf16.gmra.mrb[0].mxu0 %v542
      %v597 = vpop.f32.mrb[0].mxu0
      %v598 = vadd.f32 0.0, %v597
      %v599 = vpop.f32.mrb[0].mxu0
      %v600 = vpop.f32.mrb[0].mxu0
      %v601 = vadd.f32 0.0, %v600
      %v602 = vpop.f32.mrb[0].mxu0
      %603 = vmatprep.mubr.bf16.mxu0 0
      %604 = vmatmul.mubr.bf16.gmra.mrb[0].mxu0 %v545
      %v605 = vpop.f32.mrb[0].mxu0
      %v606 = vadd.f32 0.0, %v605
      %v607 = vpop.f32.mrb[0].mxu0
      %v608 = vpop.f32.mrb[0].mxu0
      %v609 = vadd.f32 0.0, %v608
      %v610 = vpop.f32.mrb[0].mxu0
      %611 = vdwg.mxu0
      %v612 = vadd.f32 %v478, %v582
      %v613 = vadd.f32 %v481, %v585
      %v614 = vadd.f32 %v486, %v590
      %v615 = vadd.f32 %v489, %v593
      %v616 = vadd.f32 %v494, %v598
      %v617 = vadd.f32 %v497, %v601
      %v618 = vadd.f32 %v502, %v606
      %v619 = vadd.f32 %v505, %v609
      %v620 = vld [vmem:[%s226] sm:$0x1]
      %v622 = vlaneseq
      %v623 = vshrl.u32 %v622, 7
      %v624 = vsub.s32 0, %v623
      %v625 = vrot.slane %v620, %v624
      %v627 = vadd.f32 %v612, %v625
      %v628 = vadd.f32 %v613, %v625
      %v629 = vadd.f32 %v614, %v625
      %v630 = vadd.f32 %v615, %v625
      %v631 = vadd.f32 %v616, %v625
      %v632 = vadd.f32 %v617, %v625
      %v633 = vadd.f32 %v618, %v625
      %v634 = vadd.f32 %v619, %v625
      %v635 = vmax.f32 %v627, 0.0
      %v636 = vmax.f32 %v628, 0.0
      %v637 = vmax.f32 %v629, 0.0
      %v638 = vmax.f32 %v630, 0.0
      %v639 = vmax.f32 %v631, 0.0
      %v640 = vmax.f32 %v632, 0.0
      %v641 = vmax.f32 %v633, 0.0
      %v642 = vmax.f32 %v634, 0.0
      %v643 = vlaneseq
      %v644 = vshrl.u32 %v643, 7
      %v645 = vadd.s32 %v644, 8
      %v646 = vadd.s32 %v644, 16
      %v647 = vadd.s32 %v644, 24
      %v648 = vadd.s32 %v644, 32
      %v649 = vadd.s32 %v644, 40
      %v650 = vadd.s32 %v644, 48
      %v651 = vadd.s32 %v644, 56
      %v652 = vstv %s241
      %v653 = vadd.s32 %v652, %v644
      %v654 = vadd.s32 %v652, %v645
      %v655 = vadd.s32 %v652, %v646
      %v656 = vadd.s32 %v652, %v647
      %v657 = vadd.s32 %v652, %v648
      %v658 = vadd.s32 %v652, %v649
      %v659 = vadd.s32 %v652, %v650
      %v660 = vadd.s32 %v652, %v651
      %vm661 = vcmp.lt.s32.totalorder %v653, 50
      %vm662 = vcmp.lt.s32.totalorder %v654, 50
      %vm663 = vcmp.lt.s32.totalorder %v655, 50
      %vm664 = vcmp.lt.s32.totalorder %v656, 50
      %vm665 = vcmp.lt.s32.totalorder %v657, 50
      %vm666 = vcmp.lt.s32.totalorder %v658, 50
      %vm667 = vcmp.lt.s32.totalorder %v659, 50
      %vm668 = vcmp.lt.s32.totalorder %v660, 50
      %v669 = vsel %vm661, 1, 0
      %v670 = vsel %vm662, 1, 0
      %v671 = vsel %vm663, 1, 0
      %v672 = vsel %vm664, 1, 0
      %v673 = vsel %vm665, 1, 0
      %v674 = vsel %vm666, 1, 0
      %v675 = vsel %vm667, 1, 0
      %v676 = vsel %vm668, 1, 0
      %vm677 = vcmp.eq.s32.totalorder %v669, 1
      %vm678 = vcmp.eq.s32.totalorder %v670, 1
      %vm679 = vcmp.eq.s32.totalorder %v671, 1
      %vm680 = vcmp.eq.s32.totalorder %v672, 1
      %vm681 = vcmp.eq.s32.totalorder %v673, 1
      %vm682 = vcmp.eq.s32.totalorder %v674, 1
      %vm683 = vcmp.eq.s32.totalorder %v675, 1
      %vm684 = vcmp.eq.s32.totalorder %v676, 1
      %v685 = vsel %vm677, %v635, 0.0
      %v686 = vsel %vm678, %v636, 0.0
      %v687 = vsel %vm679, %v637, 0.0
      %v688 = vsel %vm680, %v638, 0.0
      %v689 = vsel %vm681, %v639, 0.0
      %v690 = vsel %vm682, %v640, 0.0
      %v691 = vsel %vm683, %v641, 0.0
      %v692 = vsel %vm684, %v642, 0.0
      %v693 = vpack.c.bf16 %v686, %v685
      %v694 = vpack.c.bf16 %v688, %v687
      %v695 = vpack.c.bf16 %v690, %v689
      %v696 = vpack.c.bf16 %v692, %v691
      %v701 = vunpack.c.l.b16 %v693
      %v702 = vunpack.c.h.b16 %v693
      %v703 = vunpack.c.l.b16 %v694
      %v704 = vunpack.c.h.b16 %v694
      %v705 = vunpack.c.l.b16 %v695
      %v706 = vunpack.c.h.b16 %v695
      %v707 = vunpack.c.l.b16 %v696
      %v708 = vunpack.c.h.b16 %v696
      %v709 = vpack.c.b16 %v701, %v701
      %v710 = vpack.c.b16 %v702, %v702
      %v711 = vpack.c.b16 %v703, %v703
      %v712 = vpack.c.b16 %v704, %v704
      %v713 = vpack.c.b16 %v705, %v705
      %v714 = vpack.c.b16 %v706, %v706
      %v715 = vpack.c.b16 %v707, %v707
      %v716 = vpack.c.b16 %v708, %v708
      %725 = vst [vmem:[%s238] sm:$0xf] %v709
      %726 = vst [vmem:[%s238 + $0x4] sm:$0xf] %v710
      %727 = vst [vmem:[%s238 + $0x8] sm:$0xf] %v711
      %728 = vst [vmem:[%s238 + $0xc] sm:$0xf] %v712
      %729 = vst [vmem:[%s238 + $0x10] sm:$0xf] %v713
      %730 = vst [vmem:[%s238 + $0x14] sm:$0xf] %v714
      %731 = vst [vmem:[%s238 + $0x18] sm:$0xf] %v715
      %732 = vst [vmem:[%s238 + $0x1c] sm:$0xf] %v716
      %s733 = smul.u32 8, %s20
      %p734 = scmp.lt.s32.totalorder %s19, 3
      %s735 = scalar_select %p734, %s19, 3
      %p736 = scmp.lt.s32.totalorder %s733, 7
      %s737 = scalar_select %p736, %s733, 7
      %p738 = scmp.lt.s32.totalorder %s21, 0
      %s739 = scalar_select %p738, %s21, 0
      %s740 = sadd.s32 %s739, %s737
      %s741 = smul.addr %s735, 8
      %s742 = sadd.s32 %s740, %s741
      %s743 = smul.addr %s742, 4
      %s744 = scalar_lea.vmem %s3, %s743
      // Predicated region
      $region33: #{residual_block1d_forward.2} parent=31 // pred_check
        %p745 = pneg %p133
      $region34: #{residual_block1d_forward.2} parent=31 // pred_check_branch
        %747 = sbr.rel (%p745) target = $region36
      $region35: #{residual_block1d_forward.2} parent=31 // pred_region
        %s748 = smul.u32 8, %s20
      $region36: #{residual_block1d_forward.2} parent=31 // pred_fallthru
        _
    $region32: #{residual_block1d_forward.2} parent=5 // pred_fallthru
      _
    %p749 = scmp.le.s32.totalorder 2, %s9
    // Predicated region
    $region37: #{residual_block1d_forward.2} parent=5 // pred_check
      %p750 = pneg %p749
    $region38: #{residual_block1d_forward.2} parent=5 // pred_check_branch
      %752 = sbr.rel (%p750) target = $region40
    $region39: #{residual_block1d_forward.2} parent=5 // pred_region
      %s753 = ssub.s32 %s9, 2
      // Predicated region
      $region41: #{residual_block1d_forward.2} parent=39 // pred_check
        %p754 = pneg %p139
      $region42: #{residual_block1d_forward.2} parent=39 // pred_check_branch
        %756 = sbr.rel (%p754) target = $region44
      $region43: #{residual_block1d_forward.2} parent=39 // pred_region
        %s757 = smul.u32 8, %s23
        %p758 = scmp.lt.s32.totalorder %s22, 3
        %s759 = scalar_select %p758, %s22, 3
        %p760 = scmp.lt.s32.totalorder %s757, 7
        %s761 = scalar_select %p760, %s757, 7
        %p762 = scmp.lt.s32.totalorder %s24, 0
        %s763 = scalar_select %p762, %s24, 0
        %s764 = sadd.s32 %s763, %s761
        %s765 = smul.addr %s759, 8
        %s766 = sadd.s32 %s764, %s765
        %s767 = smul.addr %s766, 4
        %s768 = scalar_lea.vmem %s3, %s767
      $region44: #{residual_block1d_forward.2} parent=39 // pred_fallthru
        _
    $region40: #{residual_block1d_forward.2} parent=5 // pred_fallthru
      _
  $region6: #{residual_block1d_forward.2} parent=0 // loop_footer
    %s13 = sadd.s32 1, %s9
  $region7: #{residual_block1d_forward.2} parent=0 // loop_footer_branch
    %8 = sbr.rel target = $region3
  $region8: #{residual_block1d_forward.2} parent=0 // loop_exit
    _

// kernel: residual_block1d_forward.3
$region0: #{residual_block1d_forward.3}
  #allocation0 [shape = 'u32[]', space=smem, size = 0x4, offset = 0x4, fixed_abs, tag = 'smem constant byte address 0x4 - core index']
  #allocation1 [shape = 'u32[144,128]{1,0:T(1,128)}', space=vmem, size = 0x12000, scoped, tag = 'internal scratch']
  %s0 = inlined_call_operand.vmem [shape: bf16[4,72,128], index: 0, kind: input, shape index: {}]
  %s1 = inlined_call_operand.vmem [shape: bf16[3,128,128], index: 1, kind: input, shape index: {}]
  %s2 = inlined_call_operand.vmem [shape: f32[1,128], index: 2, kind: input, shape index: {}]
  %s3 = inlined_call_operand.vmem [shape: f32[4,64,128], index: 3, kind: input, shape index: {}]
  %s4 = inlined_call_operand.vmem [shape: f32[4,64,128], index: 4, kind: output, shape index: {}]
  %s5 = sld [smem:[#allocation0]]
  $region49: #{residual_block1d_forward.3} parent=0
    _
  %s7 = ssub.s32 1, %s5
  %s8 = scalar_select 0, %s7, %s5
  loop: start=0, step=1, limit=6
  $region2: #{residual_block1d_forward.3} parent=0 // loop_pre_header
    _
  $region3: #{residual_block1d_forward.3} parent=0 // loop_header
    %s10 = sphi 0, %s14
    %p11 = scmp.ge.s32.totalorder %s10, 6
    %s17 = sphi 0, %s36
    %s18 = sphi 0, %s32
    %s19 = sphi 0, %s28
    %s20 = sphi 0, %s17
    %s21 = sphi 0, %s18
    %s22 = sphi 0, %s19
    %s23 = sphi 0, %s20
    %s24 = sphi 0, %s21
    %s25 = sphi 0, %s22
    %s39 = sphi 0, %s41
    %s42 = sphi 0, %s39
    %s43 = sphi 0, %s42
    %s59 = sphi 0, %s43
    %s65 = sphi 0, %s67
    %s68 = sphi 0, %s65
    %s69 = sphi 0, %s68
    %s85 = sphi 0, %s69
    %s91 = sphi 0, %s93
    %s94 = sphi 0, %s91
    %s95 = sphi 0, %s94
    %s111 = sphi 0, %s95
    %s121 = sphi 0, %s123
    %s124 = sphi 0, %s121
    %s125 = sphi 0, %s124
    %s141 = sphi 0, %s125
    %s151 = sphi 0, %s153
    %s154 = sphi 0, %s151
    %s155 = sphi 0, %s154
    %s171 = sphi 0, %s155
  $region4: #{residual_block1d_forward.3} parent=0 // loop_header_branch
    %13 = sbr.rel (%p11) target = $region8
  $region5: #{residual_block1d_forward.3} parent=0 // loop_body
    %s15 = ssub.s32 %s10, 1
    %s16 = ssub.s32 %s10, 2
    %s26 = sadd.s32 1, %s19
    %p27 = scmp.ge.s32.totalorder %s26, 1
    %s28 = scalar_select %p27, 0, %s26
    %s29 = sadd.s32 1, %s18
    %s30 = scalar_select %p27, %s29, %s18
    %p31 = scmp.ge.s32.totalorder %s30, 1
    %s32 = scalar_select %p31, 0, %s30
    %s33 = sadd.s32 1, %s17
    %s34 = scalar_select %p31, %s33, %s17
    %p35 = scmp.ge.s32.totalorder %s34, 4
    %s36 = scalar_select %p35, 0, %s34
    %s37 = ssub.s32 %s17, %s36
    %p38 = scmp.eq.s32.totalorder %s37, 0
    %s40 = sadd.s32 %s39, 1
    %s41 = scalar_select %p38, %s39, %s40
    %p44 = pneg %p38
    %p45 = scmp.eq.s32.totalorder %s10, 3
    %p46 = por %p44, %p45
    %p47 = scmp.ne.s32.totalorder %s39, %s42
    %p48 = scmp.eq.s32.totalorder %s10, 0
    %p49 = por %p47, %p48
    %p50 = scmp.ne.s32.totalorder %s39, %s42
    %p51 = scmp.eq.s32.totalorder %s15, 3
    %p52 = por %p50, %p51
    %p53 = scmp.ne.s32.totalorder %s42, %s43
    %p54 = scmp.eq.s32.totalorder %s15, 0
    %p55 = por %p53, %p54
    %p56 = scmp.ne.s32.totalorder %s42, %s43
    %p57 = scmp.eq.s32.totalorder %s16, 3
    %p58 = por %p56, %p57
    %p60 = scmp.ne.s32.totalorder %s43, %s59
    %p61 = scmp.eq.s32.totalorder %s16, 0
    %p62 = por %p60, %p61
    %s63 = ssub.s32 %s19, %s28
    %p64 = scmp.eq.s32.totalorder %s63, 0
    %s66 = sadd.s32 %s65, 1
    %s67 = scalar_select %p64, %s65, %s66
    %p70 = pneg %p64
    %p71 = scmp.eq.s32.totalorder %s10, 3
    %p72 = por %p70, %p71
    %p73 = scmp.ne.s32.totalorder %s65, %s68
    %p74 = scmp.eq.s32.totalorder %s10, 0
    %p75 = por %p73, %p74
    %p76 = scmp.ne.s32.totalorder %s65, %s68
    %p77 = scmp.eq.s32.totalorder %s15, 3
    %p78 = por %p76, %p77
    %p79 = scmp.ne.s32.totalorder %s68, %s69
    %p80 = scmp.eq.s32.totalorder %s15, 0
    %p81 = por %p79, %p80
    %p82 = scmp.ne.s32.totalorder %s68, %s69
    %p83 = scmp.eq.s32.totalorder %s16, 3
    %p84 = por %p82, %p83
    %p86 = scmp.ne.s32.totalorder %s69, %s85
    %p87 = scmp.eq.s32.totalorder %s16, 0
    %p88 = por %p86, %p87
    %s89 = ssub.s32 %s19, %s28
    %p90 = scmp.eq.s32.totalorder %s89, 0
    %s92 = sadd.s32 %s91, 1
    %s93 = scalar_select %p90, %s91, %s92
    %p96 = pneg %p90
    %p97 = scmp.eq.s32.totalorder %s10, 3
    %p98 = por %p96, %p97
    %p99 = scmp.ne.s32.totalorder %s91, %s94
    %p100 = scmp.eq.s32.totalorder %s10, 0
    %p101 = por %p99, %p100
    %p102 = scmp.ne.s32.totalorder %s91, %s94
    %p103 = scmp.eq.s32.totalorder %s15, 3
    %p104 = por %p102, %p103
    %p105 = scmp.ne.s32.totalorder %s94, %s95
    %p106 = scmp.eq.s32.totalorder %s15, 0
    %p107 = por %p105, %p106
    %p108 = scmp.ne.s32.totalorder %s94, %s95
    %p109 = scmp.eq.s32.totalorder %s16, 3
    %p110 = por %p108, %p109
    %p112 = scmp.ne.s32.totalorder %s95, %s111
    %p113 = scmp.eq.s32.totalorder %s16, 0
    %p114 = por %p112, %p113
    %s115 = ssub.s32 %s17, %s36
    %s116 = ssub.s32 %s18, %s32
    %s117 = sor.u32 %s115, %s116
    %s118 = ssub.s32 %s19, %s28
    %s119 = sor.u32 %s117, %s118
    %p120 = scmp.eq.s32.totalorder %s119, 0
    %s122 = sadd.s32 %s121, 1
    %s123 = scalar_select %p120, %s121, %s122
    %p126 = pneg %p120
    %p127 = scmp.eq.s32.totalorder %s10, 3
    %p128 = por %p126, %p127
    %p129 = scmp.ne.s32.totalorder %s121, %s124
    %p130 = scmp.eq.s32.totalorder %s10, 0
    %p131 = por %p129, %p130
    %p132 = scmp.ne.s32.totalorder %s121, %s124
    %p133 = scmp.eq.s32.totalorder %s15, 3
    %p134 = por %p132, %p133
    %p135 = scmp.ne.s32.totalorder %s124, %s125
    %p136 = scmp.eq.s32.totalorder %s15, 0
    %p137 = por %p135, %p136
    %p138 = scmp.ne.s32.totalorder %s124, %s125
    %p139 = scmp.eq.s32.totalorder %s16, 3
    %p140 = por %p138, %p139
    %p142 = scmp.ne.s32.totalorder %s125, %s141
    %p143 = scmp.eq.s32.totalorder %s16, 0
    %p144 = por %p142, %p143
    %s145 = ssub.s32 %s17, %s36
    %s146 = ssub.s32 %s18, %s32
    %s147 = sor.u32 %s145, %s146
    %s148 = ssub.s32 %s19, %s28
    %s149 = sor.u32 %s147, %s148
    %p150 = scmp.eq.s32.totalorder %s149, 0
    %s152 = sadd.s32 %s151, 1
    %s153 = scalar_select %p150, %s151, %s152
    %p156 = pneg %p150
    %p157 = scmp.eq.s32.totalorder %s10, 3
    %p158 = por %p156, %p157
    %p159 = scmp.ne.s32.totalorder %s151, %s154
    %p160 = scmp.eq.s32.totalorder %s10, 0
    %p161 = por %p159, %p160
    %p162 = scmp.ne.s32.totalorder %s151, %s154
    %p163 = scmp.eq.s32.totalorder %s15, 3
    %p164 = por %p162, %p163
    %p165 = scmp.ne.s32.totalorder %s154, %s155
    %p166 = scmp.eq.s32.totalorder %s15, 0
    %p167 = por %p165, %p166
    %p168 = scmp.ne.s32.totalorder %s154, %s155
    %p169 = scmp.eq.s32.totalorder %s16, 3
    %p170 = por %p168, %p169
    %p172 = scmp.ne.s32.totalorder %s155, %s171
    %p173 = scmp.eq.s32.totalorder %s16, 0
    %p174 = por %p172, %p173
    %p175 = scmp.le.s32.totalorder 1, %s10
    %p176 = scmp.lt.s32.totalorder %s10, 5
    %p177 = pnand %p175, %p176
    %p178 = pneg %p177
    // Predicated region
    $region9: #{residual_block1d_forward.3} parent=5 // pred_check
      _
    $region10: #{residual_block1d_forward.3} parent=5 // pred_check_branch
      %180 = sbr.rel (%p177) target = $region12
    $region11: #{residual_block1d_forward.3} parent=5 // pred_region
      %s181 = ssub.s32 %s10, 1
      // Predicated region
      $region13: #{residual_block1d_forward.3} parent=11 // pred_check
        %p182 = pneg %p81
      $region14: #{residual_block1d_forward.3} parent=11 // pred_check_branch
        %184 = sbr.rel (%p182) target = $region16
      $region15: #{residual_block1d_forward.3} parent=11 // pred_region
        %p185 = scmp.lt.s32.totalorder %s22, 0
        %s186 = scalar_select %p185, %s22, 0
        %s187 = smul.addr %s186, 4
        %s188 = scalar_lea.vmem %s1, %s187
      $region16: #{residual_block1d_forward.3} parent=11 // pred_fallthru
        _
      // Predicated region
      $region17: #{residual_block1d_forward.3} parent=11 // pred_check
        %p189 = pneg %p107
      $region18: #{residual_block1d_forward.3} parent=11 // pred_check_branch
        %191 = sbr.rel (%p189) target = $region20
      $region19: #{residual_block1d_forward.3} parent=11 // pred_region
        %p192 = scmp.lt.s32.totalorder %s22, 0
        %s193 = scalar_select %p192, %s22, 0
        %s194 = scalar_lea.vmem %s2, %s193
      $region20: #{residual_block1d_forward.3} parent=11 // pred_fallthru
        _
    $region12: #{residual_block1d_forward.3} parent=5 // pred_fallthru
      _
    %p195 = scmp.lt.s32.totalorder %s10, 4
    // Predicated region
    $region21: #{residual_block1d_forward.3} parent=5 // pred_check
      %p196 = pneg %p195
    $region22: #{residual_block1d_forward.3} parent=5 // pred_check_branch
      %198 = sbr.rel (%p196) target = $region24
    $region23: #{residual_block1d_forward.3} parent=5 // pred_region
      // Predicated region
      $region25: #{residual_block1d_forward.3} parent=23 // pred_check
        %p199 = pneg %p49
      $region26: #{residual_block1d_forward.3} parent=23 // pred_check_branch
        %201 = sbr.rel (%p199) target = $region28
      $region27: #{residual_block1d_forward.3} parent=23 // pred_region
        %p202 = scmp.lt.s32.totalorder %s17, 3
        %s203 = scalar_select %p202, %s17, 3
        %s204 = smul.addr %s203, 9
        %s205 = smul.addr %s204, 4
        %s206 = scalar_lea.vmem %s0, %s205
      $region28: #{residual_block1d_forward.3} parent=23 // pred_fallthru
        _
      // Predicated region
      $region29: #{residual_block1d_forward.3} parent=23 // pred_check
        %p207 = pneg %p131
      $region30: #{residual_block1d_forward.3} parent=23 // pred_check_branch
        %209 = sbr.rel (%p207) target = $region32
      $region31: #{residual_block1d_forward.3} parent=23 // pred_region
        %s210 = smul.u32 8, %s18
        %p211 = scmp.lt.s32.totalorder %s17, 3
        %s212 = scalar_select %p211, %s17, 3
        %p213 = scmp.lt.s32.totalorder %s210, 7
        %s214 = scalar_select %p213, %s210, 7
        %p215 = scmp.lt.s32.totalorder %s19, 0
        %s216 = scalar_select %p215, %s19, 0
        %s217 = sadd.s32 %s216, %s214
        %s218 = smul.addr %s212, 8
        %s219 = sadd.s32 %s217, %s218
        %s220 = smul.addr %s219, 8
        %s221 = scalar_lea.vmem %s3, %s220
        %s222 = smul.u32 8, %s18
      $region32: #{residual_block1d_forward.3} parent=23 // pred_fallthru
        _
    $region24: #{residual_block1d_forward.3} parent=5 // pred_fallthru
      _
    %p223 = scmp.le.s32.totalorder 1, %s10
    %p224 = scmp.lt.s32.totalorder %s10, 5
    %p225 = pnand %p223, %p224
    %p226 = pneg %p225
    // Predicated region
    $region33: #{residual_block1d_forward.3} parent=5 // pred_check
      _
    $region34: #{residual_block1d_forward.3} parent=5 // pred_check_branch
      %228 = sbr.rel (%p225) target = $region36
    $region35: #{residual_block1d_forward.3} parent=5 // pred_region
      %s229 = ssub.s32 %s10, 1
      %p230 = scmp.lt.s32.totalorder %s20, 3
      %s231 = scalar_select %p230, %s20, 3
      %s232 = smul.addr %s231, 9
      %s233 = smul.addr %s232, 4
      %s234 = scalar_lea.vmem %s0, %s233
      %p235 = pneg %p55
      %p236 = pneg %p52
      %p237 = scmp.lt.s32.totalorder %s22, 0
      %s238 = scalar_select %p237, %s22, 0
      %s239 = smul.addr %s238, 4
      %s240 = scalar_lea.vmem %s1, %s239
      %p241 = pneg %p81
      %p242 = pneg %p78
      %p243 = scmp.lt.s32.totalorder %s22, 0
      %s244 = scalar_select %p243, %s22, 0
      %s245 = scalar_lea.vmem %s2, %s244
      %p246 = pneg %p107
      %p247 = pneg %p104
      %s248 = smul.u32 8, %s21
      %p249 = scmp.lt.s32.totalorder %s20, 3
      %s250 = scalar_select %p249, %s20, 3
      %p251 = scmp.lt.s32.totalorder %s248, 7
      %s252 = scalar_select %p251, %s248, 7
      %p253 = scmp.lt.s32.totalorder %s22, 0
      %s254 = scalar_select %p253, %s22, 0
      %s255 = sadd.s32 %s254, %s252
      %s256 = smul.addr %s250, 8
      %s257 = sadd.s32 %s255, %s256
      %s258 = smul.addr %s257, 8
      %s259 = scalar_lea.vmem %s3, %s258
      %p260 = pneg %p137
      %p261 = pneg %p134
      %p262 = pneg %p167
      %p263 = pneg %p164
      %s264 = smul.u32 8, %s21
      %p265 = scmp.lt.s32.totalorder %s20, 3
      %s266 = scalar_select %p265, %s20, 3
      %p267 = scmp.lt.s32.totalorder %s264, 7
      %s268 = scalar_select %p267, %s264, 7
      %p269 = scmp.lt.s32.totalorder %s22, 0
      %s270 = scalar_select %p269, %s22, 0
      %s271 = sadd.s32 %s270, %s268
      %s272 = smul.addr %s266, 8
      %s273 = sadd.s32 %s271, %s272
      %s274 = smul.addr %s273, 8
      %s275 = scalar_lea.vmem %s4, %s274
      %p276 = scmp.lt.s32.totalorder %s20, 3
      %s277 = scalar_select %p276, %s20, 3
      %s278 = smul.addr %s277, 9
      %s279 = smul.addr %s278, 4
      %s280 = scalar_lea.vmem %s0, %s279
      %p281 = scmp.lt.s32.totalorder %s22, 0
      %s282 = scalar_select %p281, %s22, 0
      %s283 = smul.addr %s282, 4
      %s284 = scalar_lea.vmem %s1, %s283
      %p285 = scmp.lt.s32.totalorder %s22, 0
      %s286 = scalar_select %p285, %s22, 0
      %s287 = scalar_lea.vmem %s2, %s286
      %s288 = smul.u32 8, %s21
      %p289 = scmp.lt.s32.totalorder %s20, 3
      %s290 = scalar_select %p289, %s20, 3
      %p291 = scmp.lt.s32.totalorder %s288, 7
      %s292 = scalar_select %p291, %s288, 7
      %p293 = scmp.lt.s32.totalorder %s22, 0
      %s294 = scalar_select %p293, %s22, 0
      %s295 = sadd.s32 %s294, %s292
      %s296 = smul.addr %s290, 8
      %s297 = sadd.s32 %s295, %s296
      %s298 = smul.addr %s297, 8
      %s299 = scalar_lea.vmem %s3, %s298
      %s300 = smul.u32 8, %s21
      %s301 = smul.u32 8, %s21
      %p302 = scmp.lt.s32.totalorder %s20, 3
      %s303 = scalar_select %p302, %s20, 3
      %p304 = scmp.lt.s32.totalorder %s301, 7
      %s305 = scalar_select %p304, %s301, 7
      %p306 = scmp.lt.s32.totalorder %s22, 0
      %s307 = scalar_select %p306, %s22, 0
      %s308 = sadd.s32 %s307, %s305
      %s309 = smul.addr %s303, 8
      %s310 = sadd.s32 %s308, %s309
      %s311 = smul.addr %s310, 8
      %s312 = scalar_lea.vmem %s4, %s311
      %s313 = smul.u32 8, %s21
      %s315 = smul.u32 %s21, 64
      %s316 = sshra.s32 %s315, 3
      %s317 = sand.u32 %s315, 7
      %s318 = smul.addr %s316, 4
      %s319 = scalar_lea.vmem %s280, %s318
      %v320 = vld [vmem:[%s319] sm:$0xf]
      %v321 = vld [vmem:[%s319 + $0x4] sm:$0xf]
      %v322 = vld [vmem:[%s319 + $0x8] sm:$0xf]
      %v323 = vld [vmem:[%s319 + $0xc] sm:$0xf]
      %v324 = vld [vmem:[%s319 + $0x10] sm:$0xf]
      %v325 = vld [vmem:[%s319 + $0x14] sm:$0xf]
      %v326 = vld [vmem:[%s319 + $0x18] sm:$0xf]
      %v327 = vld [vmem:[%s319 + $0x1c] sm:$0xf]
      %v328 = vld [vmem:[%s319 + $0x20] sm:$0xf]
      %v329 = vld [vmem:[%s284] sm:$0xf]
      %v330 = vld [vmem:[%s284 + $0x4] sm:$0xf]
      %v331 = vld [vmem:[%s284 + $0x8] sm:$0xf]
      %v332 = vld [vmem:[%s284 + $0xc] sm:$0xf]
      %v333 = vld [vmem:[%s284 + $0x10] sm:$0xf]
      %v334 = vld [vmem:[%s284 + $0x14] sm:$0xf]
      %v335 = vld [vmem:[%s284 + $0x18] sm:$0xf]
      %v336 = vld [vmem:[%s284 + $0x1c] sm:$0xf]
      %v337 = vld [vmem:[%s284 + $0x20] sm:$0xf]
      %v338 = vld [vmem:[%s284 + $0x24] sm:$0xf]
      %v339 = vld [vmem:[%s284 + $0x28] sm:$0xf]
      %v340 = vld [vmem:[%s284 + $0x2c] sm:$0xf]
      %v341 = vld [vmem:[%s284 + $0x30] sm:$0xf]
      %v342 = vld [vmem:[%s284 + $0x34] sm:$0xf]
      %v343 = vld [vmem:[%s284 + $0x38] sm:$0xf]
      %v344 = vld [vmem:[%s284 + $0x3c] sm:$0xf]
      %s345 = scalar_lea.vmem %s284, 64
      %v346 = vld [vmem:[%s345] sm:$0xf]
      %v347 = vld [vmem:[%s345 + $0x4] sm:$0xf]
      %v348 = vld [vmem:[%s345 + $0x8] sm:$0xf]
      %v349 = vld [vmem:[%s345 + $0xc] sm:$0xf]
      %v350 = vld [vmem:[%s345 + $0x10] sm:$0xf]
      %v351 = vld [vmem:[%s345 + $0x14] sm:$0xf]
      %v352 = vld [vmem:[%s345 + $0x18] sm:$0xf]
      %v353 = vld [vmem:[%s345 + $0x1c] sm:$0xf]
      %v354 = vld [vmem:[%s345 + $0x20] sm:$0xf]
      %v355 = vld [vmem:[%s345 + $0x24] sm:$0xf]
      %v356 = vld [vmem:[%s345 + $0x28] sm:$0xf]
      %v357 = vld [vmem:[%s345 + $0x2c] sm:$0xf]
      %v358 = vld [vmem:[%s345 + $0x30] sm:$0xf]
      %v359 = vld [vmem:[%s345 + $0x34] sm:$0xf]
      %v360 = vld [vmem:[%s345 + $0x38] sm:$0xf]
      %v361 = vld [vmem:[%s345 + $0x3c] sm:$0xf]
      %v371 = vunpack.c.l.b16 %v320
      %v372 = vunpack.c.l.b16 %v321
      %v373 = vunpack.c.l.b16 %v322
      %v374 = vunpack.c.l.b16 %v323
      %v375 = vunpack.c.l.b16 %v324
      %v376 = vunpack.c.l.b16 %v325
      %v377 = vunpack.c.l.b16 %v326
      %v378 = vunpack.c.l.b16 %v327
      %v379 = vunpack.c.l.b16 %v328
      %v380 = vpack.c.b16 %v372, %v371
      %v381 = vpack.c.b16 %v374, %v373
      %v382 = vpack.c.b16 %v376, %v375
      %v383 = vpack.c.b16 %v378, %v377
      %v384 = vpack.c.b16 %v379, %v379
      %vm385 = vsmask.f32 7424
      %v387 = vshrl.u32 %v380, 16
      %v389 = vshll.u32 %v380, 16
      %v391 = vrot.slane %v389, 1
      %v392 = vor.u32 %v387, %v391
      %v394 = vshll.u32 %v381, 16
      %v396 = vrot.slane %v394, 1
      %v397 = vsel %vm385, %v392, %v396
      %v398 = vshrl.u32 %v381, 16
      %v400 = vor.u32 %v398, %v396
      %v402 = vshll.u32 %v382, 16
      %v404 = vrot.slane %v402, 1
      %v405 = vsel %vm385, %v400, %v404
      %v406 = vshrl.u32 %v382, 16
      %v408 = vor.u32 %v406, %v404
      %v410 = vshll.u32 %v383, 16
      %v412 = vrot.slane %v410, 1
      %v413 = vsel %vm385, %v408, %v412
      %v414 = vshrl.u32 %v383, 16
      %v416 = vor.u32 %v414, %v412
      %v418 = vshll.u32 %v384, 16
      %v420 = vrot.slane %v418, 1
      %v421 = vsel %vm385, %v416, %v420
      %v442 = vunpack.c.l.b16 %v346
      %v443 = vunpack.c.l.b16 %v347
      %v444 = vunpack.c.l.b16 %v348
      %v445 = vunpack.c.l.b16 %v349
      %v446 = vunpack.c.l.b16 %v350
      %v447 = vunpack.c.l.b16 %v351
      %v448 = vunpack.c.l.b16 %v352
      %v449 = vunpack.c.l.b16 %v353
      %v450 = vunpack.c.l.b16 %v354
      %v451 = vunpack.c.l.b16 %v355
      %v452 = vunpack.c.l.b16 %v356
      %v453 = vunpack.c.l.b16 %v357
      %v454 = vunpack.c.l.b16 %v358
      %v455 = vunpack.c.l.b16 %v359
      %v456 = vunpack.c.l.b16 %v360
      %v457 = vunpack.c.l.b16 %v361
      %v458 = vpack.c.b16 %v443, %v442
      %v459 = vpack.c.b16 %v445, %v444
      %v460 = vpack.c.b16 %v447, %v446
      %v461 = vpack.c.b16 %v449, %v448
      %v462 = vpack.c.b16 %v451, %v450
      %v463 = vpack.c.b16 %v453, %v452
      %v464 = vpack.c.b16 %v455, %v454
      %v465 = vpack.c.b16 %v457, %v456
      %474 = vmatprep.subr.bf16.mxu0 0
      %475 = vmatpush1.bf16.msra.mxu0 %v458
      %476 = vmatprep.subr.bf16.mxu0 0
      %477 = vmatpush1.bf16.msra.mxu0 %v459
      %478 = vmatprep.subr.bf16.mxu0 0
      %479 = vmatpush1.bf16.msra.mxu0 %v460
      %480 = vmatprep.subr.bf16.mxu0 0
      %481 = vmatpush1.bf16.msra.mxu0 %v461
      %482 = vmatprep.subr.bf16.mxu0 0
      %483 = vmatpush1.bf16.msra.mxu0 %v462
      %484 = vmatprep.subr.bf16.mxu0 0
      %485 = vmatpush1.bf16.msra.mxu0 %v463
      %486 = vmatprep.subr.bf16.mxu0 0
      %487 = vmatpush1.bf16.msra.mxu0 %v464
      %488 = vmatprep.subr.bf16.mxu0 0
      %489 = vmatpush1.bf16.msra.mxu0 %v465
      %490 = vmatprep.subr.bf16.mxu0 0
      %491 = vmatpush1.bf16.msra.mxu0 0
      %492 = vmatprep.subr.bf16.mxu0 0
      %493 = vmatpush1.bf16.msra.mxu0 0
      %494 = vmatprep.subr.bf16.mxu0 0
      %495 = vmatpush1.bf16.msra.mxu0 0
      %496 = vmatprep.subr.bf16.mxu0 0
      %497 = vmatpush1.bf16.msra.mxu0 0
      %498 = vmatprep.subr.bf16.mxu0 0
      %499 = vmatpush1.bf16.msra.mxu0 0
      %500 = vmatprep.subr.bf16.mxu0 0
      %501 = vmatpush1.bf16.msra.mxu0 0
      %502 = vmatprep.subr.bf16.mxu0 0
      %503 = vmatpush1.bf16.msra.mxu0 0
      %504 = vmatprep.subr.bf16.mxu0 0
      %505 = vmatpush1.bf16.msra.mxu0 0
      %506 = vmatprep.mubr.bf16.mxu0 0
      %507 = vmatmul.mubr.bf16.gmra.mrb[0].mxu0 %v397
      %v508 = vpop.f32.mrb[0].mxu0
      %v509 = vadd.f32 0.0, %v508
      %v510 = vpop.f32.mrb[0].mxu0
      %v511 = vpop.f32.mrb[0].mxu0
      %v512 = vadd.f32 0.0, %v511
      %v513 = vpop.f32.mrb[0].mxu0
      %514 = vmatprep.mubr.bf16.mxu0 0
      %515 = vmatmul.mubr.bf16.gmra.mrb[0].mxu0 %v405
      %v516 = vpop.f32.mrb[0].mxu0
      %v517 = vadd.f32 0.0, %v516
      %v518 = vpop.f32.mrb[0].mxu0
      %v519 = vpop.f32.mrb[0].mxu0
      %v520 = vadd.f32 0.0, %v519
      %v521 = vpop.f32.mrb[0].mxu0
      %522 = vmatprep.mubr.bf16.mxu0 0
      %523 = vmatmul.mubr.bf16.gmra.mrb[0].mxu0 %v413
      %v524 = vpop.f32.mrb[0].mxu0
      %v525 = vadd.f32 0.0, %v524
      %v526 = vpop.f32.mrb[0].mxu0
      %v527 = vpop.f32.mrb[0].mxu0
      %v528 = vadd.f32 0.0, %v527
      %v529 = vpop.f32.mrb[0].mxu0
      %530 = vmatprep.mubr.bf16.mxu0 0
      %531 = vmatmul.mubr.bf16.gmra.mrb[0].mxu0 %v421
      %v532 = vpop.f32.mrb[0].mxu0
      %v533 = vadd.f32 0.0, %v532
      %v534 = vpop.f32.mrb[0].mxu0
      %v535 = vpop.f32.mrb[0].mxu0
      %v536 = vadd.f32 0.0, %v535
      %v537 = vpop.f32.mrb[0].mxu0
      %538 = vdwg.mxu0
      %v559 = vunpack.c.l.b16 %v329
      %v560 = vunpack.c.l.b16 %v330
      %v561 = vunpack.c.l.b16 %v331
      %v562 = vunpack.c.l.b16 %v332
      %v563 = vunpack.c.l.b16 %v333
      %v564 = vunpack.c.l.b16 %v334
      %v565 = vunpack.c.l.b16 %v335
      %v566 = vunpack.c.l.b16 %v336
      %v567 = vunpack.c.l.b16 %v337
      %v568 = vunpack.c.l.b16 %v338
      %v569 = vunpack.c.l.b16 %v339
      %v570 = vunpack.c.l.b16 %v340
      %v571 = vunpack.c.l.b16 %v341
      %v572 = vunpack.c.l.b16 %v342
      %v573 = vunpack.c.l.b16 %v343
      %v574 = vunpack.c.l.b16 %v344
      %v575 = vpack.c.b16 %v560, %v559
      %v576 = vpack.c.b16 %v562, %v561
      %v577 = vpack.c.b16 %v564, %v563
      %v578 = vpack.c.b16 %v566, %v565
      %v579 = vpack.c.b16 %v568, %v567
      %v580 = vpack.c.b16 %v570, %v569
      %v581 = vpack.c.b16 %v572, %v571
      %v582 = vpack.c.b16 %v574, %v573
      %591 = vmatprep.subr.bf16.mxu0 0
      %592 = vmatpush1.bf16.msra.mxu0 %v575
      %593 = vmatprep.subr.bf16.mxu0 0
      %594 = vmatpush1.bf16.msra.mxu0 %v576
      %595 = vmatprep.subr.bf16.mxu0 0
      %596 = vmatpush1.bf16.msra.mxu0 %v577
      %597 = vmatprep.subr.bf16.mxu0 0
      %598 = vmatpush1.bf16.msra.mxu0 %v578
      %599 = vmatprep.subr.bf16.mxu0 0
      %600 = vmatpush1.bf16.msra.mxu0 %v579
      %601 = vmatprep.subr.bf16.mxu0 0
      %602 = vmatpush1.bf16.msra.mxu0 %v580
      %603 = vmatprep.subr.bf16.mxu0 0
      %604 = vmatpush1.bf16.msra.mxu0 %v581
      %605 = vmatprep.subr.bf16.mxu0 0
      %606 = vmatpush1.bf16.msra.mxu0 %v582
      %607 = vmatprep.subr.bf16.mxu0 0
      %608 = vmatpush1.bf16.msra.mxu0 0
      %609 = vmatprep.subr.bf16.mxu0 0
      %610 = vmatpush1.bf16.msra.mxu0 0
      %611 = vmatprep.subr.bf16.mxu0 0
      %612 = vmatpush1.bf16.msra.mxu0 0
      %613 = vmatprep.subr.bf16.mxu0 0
      %614 = vmatpush1.bf16.msra.mxu0 0
      %615 = vmatprep.subr.bf16.mxu0 0
      %616 = vmatpush1.bf16.msra.mxu0 0
      %617 = vmatprep.subr.bf16.mxu0 0
      %618 = vmatpush1.bf16.msra.mxu0 0
      %619 = vmatprep.subr.bf16.mxu0 0
      %620 = vmatpush1.bf16.msra.mxu0 0
      %621 = vmatprep.subr.bf16.mxu0 0
      %622 = vmatpush1.bf16.msra.mxu0 0
      %623 = vmatprep.mubr.bf16.mxu0 0
      %624 = vmatmul.mubr.bf16.gmra.mrb[0].mxu0 %v380
      %v625 = vpop.f32.mrb[0].mxu0
      %v626 = vadd.f32 %v509, %v625
      %v627 = vpop.f32.mrb[0].mxu0
      %v628 = vpop.f32.mrb[0].mxu0
      %v629 = vadd.f32 %v512, %v628
      %v630 = vpop.f32.mrb[0].mxu0
      %631 = vmatprep.mubr.bf16.mxu0 0
      %632 = vmatmul.mubr.bf16.gmra.mrb[0].mxu0 %v381
      %v633 = vpop.f32.mrb[0].mxu0
      %v634 = vadd.f32 %v517, %v633
      %v635 = vpop.f32.mrb[0].mxu0
      %v636 = vpop.f32.mrb[0].mxu0
      %v637 = vadd.f32 %v520, %v636
      %v638 = vpop.f32.mrb[0].mxu0
      %639 = vmatprep.mubr.bf16.mxu0 0
      %640 = vmatmul.mubr.bf16.gmra.mrb[0].mxu0 %v382
      %v641 = vpop.f32.mrb[0].mxu0
      %v642 = vadd.f32 %v525, %v641
      %v643 = vpop.f32.mrb[0].mxu0
      %v644 = vpop.f32.mrb[0].mxu0
      %v645 = vadd.f32 %v528, %v644
      %v646 = vpop.f32.mrb[0].mxu0
      %647 = vmatprep.mubr.bf16.mxu0 0
      %648 = vmatmul.mubr.bf16.gmra.mrb[0].mxu0 %v383
      %v649 = vpop.f32.mrb[0].mxu0
      %v650 = vadd.f32 %v533, %v649
      %v651 = vpop.f32.mrb[0].mxu0
      %v652 = vpop.f32.mrb[0].mxu0
      %v653 = vadd.f32 %v536, %v652
      %v654 = vpop.f32.mrb[0].mxu0
      %655 = vdwg.mxu0
      %s656 = scalar_lea.vmem %s284, 128
      %v657 = vld [vmem:[%s656] sm:$0xf]
      %v658 = vld [vmem:[%s656 + $0x4] sm:$0xf]
      %v659 = vld [vmem:[%s656 + $0x8] sm:$0xf]
      %v660 = vld [vmem:[%s656 + $0xc] sm:$0xf]
      %v661 = vld [vmem:[%s656 + $0x10] sm:$0xf]
      %v662 = vld [vmem:[%s656 + $0x14] sm:$0xf]
      %v663 = vld [vmem:[%s656 + $0x18] sm:$0xf]
      %v664 = vld [vmem:[%s656 + $0x1c] sm:$0xf]
      %v665 = vld [vmem:[%s656 + $0x20] sm:$0xf]
      %v666 = vld [vmem:[%s656 + $0x24] sm:$0xf]
      %v667 = vld [vmem:[%s656 + $0x28] sm:$0xf]
      %v668 = vld [vmem:[%s656 + $0x2c] sm:$0xf]
      %v669 = vld [vmem:[%s656 + $0x30] sm:$0xf]
      %v670 = vld [vmem:[%s656 + $0x34] sm:$0xf]
      %v671 = vld [vmem:[%s656 + $0x38] sm:$0xf]
      %v672 = vld [vmem:[%s656 + $0x3c] sm:$0xf]
      %vm673 = vcmask 1046528
      %v674 = vrot.slane %v380, 1
      %v675 = vrot.slane %v381, 1
      %v676 = vsel %vm673, %v674, %v675
      %v677 = vrot.slane %v382, 1
      %v678 = vsel %vm673, %v675, %v677
      %v679 = vrot.slane %v383, 1
      %v680 = vsel %vm673, %v677, %v679
      %v681 = vrot.slane %v384, 1
      %v682 = vsel %vm673, %v679, %v681
      %v703 = vunpack.c.l.b16 %v657
      %v704 = vunpack.c.l.b16 %v658
      %v705 = vunpack.c.l.b16 %v659
      %v706 = vunpack.c.l.b16 %v660
      %v707 = vunpack.c.l.b16 %v661
      %v708 = vunpack.c.l.b16 %v662
      %v709 = vunpack.c.l.b16 %v663
      %v710 = vunpack.c.l.b16 %v664
      %v711 = vunpack.c.l.b16 %v665
      %v712 = vunpack.c.l.b16 %v666
      %v713 = vunpack.c.l.b16 %v667
      %v714 = vunpack.c.l.b16 %v668
      %v715 = vunpack.c.l.b16 %v669
      %v716 = vunpack.c.l.b16 %v670
      %v717 = vunpack.c.l.b16 %v671
      %v718 = vunpack.c.l.b16 %v672
      %v719 = vpack.c.b16 %v704, %v703
      %v720 = vpack.c.b16 %v706, %v705
      %v721 = vpack.c.b16 %v708, %v707
      %v722 = vpack.c.b16 %v710, %v709
      %v723 = vpack.c.b16 %v712, %v711
      %v724 = vpack.c.b16 %v714, %v713
      %v725 = vpack.c.b16 %v716, %v715
      %v726 = vpack.c.b16 %v718, %v717
      %735 = vmatprep.subr.bf16.mxu0 0
      %736 = vmatpush1.bf16.msra.mxu0 %v719
      %737 = vmatprep.subr.bf16.mxu0 0
      %738 = vmatpush1.bf16.msra.mxu0 %v720
      %739 = vmatprep.subr.bf16.mxu0 0
      %740 = vmatpush1.bf16.msra.mxu0 %v721
      %741 = vmatprep.subr.bf16.mxu0 0
      %742 = vmatpush1.bf16.msra.mxu0 %v722
      %743 = vmatprep.subr.bf16.mxu0 0
      %744 = vmatpush1.bf16.msra.mxu0 %v723
      %745 = vmatprep.subr.bf16.mxu0 0
      %746 = vmatpush1.bf16.msra.mxu0 %v724
      %747 = vmatprep.subr.bf16.mxu0 0
      %748 = vmatpush1.bf16.msra.mxu0 %v725
      %749 = vmatprep.subr.bf16.mxu0 0
      %750 = vmatpush1.bf16.msra.mxu0 %v726
      %751 = vmatprep.subr.bf16.mxu0 0
      %752 = vmatpush1.bf16.msra.mxu0 0
      %753 = vmatprep.subr.bf16.mxu0 0
      %754 = vmatpush1.bf16.msra.mxu0 0
      %755 = vmatprep.subr.bf16.mxu0 0
      %756 = vmatpush1.bf16.msra.mxu0 0
      %757 = vmatprep.subr.bf16.mxu0 0
      %758 = vmatpush1.bf16.msra.mxu0 0
      %759 = vmatprep.subr.bf16.mxu0 0
      %760 = vmatpush1.bf16.msra.mxu0 0
      %761 = vmatprep.subr.bf16.mxu0 0
      %762 = vmatpush1.bf16.msra.mxu0 0
      %763 = vmatprep.subr.bf16.mxu0 0
      %764 = vmatpush1.bf16.msra.mxu0 0
      %765 = vmatprep.subr.bf16.mxu0 0
      %766 = vmatpush1.bf16.msra.mxu0 0
      %767 = vmatprep.mubr.bf16.mxu0 0
      %768 = vmatmul.mubr.bf16.gmra.mrb[0].mxu0 %v676
      %v769 = vpop.f32.mrb[0].mxu0
      %v770 = vadd.f32 0.0, %v769
      %v771 = vpop.f32.mrb[0].mxu0
      %v772 = vpop.f32.mrb[0].mxu0
      %v773 = vadd.f32 0.0, %v772
      %v774 = vpop.f32.mrb[0].mxu0
      %775 = vmatprep.mubr.bf16.mxu0 0
      %776 = vmatmul.mubr.bf16.gmra.mrb[0].mxu0 %v678
      %v777 = vpop.f32.mrb[0].mxu0
      %v778 = vadd.f32 0.0, %v777
      %v779 = vpop.f32.mrb[0].mxu0
      %v780 = vpop.f32.mrb[0].mxu0
      %v781 = vadd.f32 0.0, %v780
      %v782 = vpop.f32.mrb[0].mxu0
      %783 = vmatprep.mubr.bf16.mxu0 0
      %784 = vmatmul.mubr.bf16.gmra.mrb[0].mxu0 %v680
      %v785 = vpop.f32.mrb[0].mxu0
      %v786 = vadd.f32 0.0, %v785
      %v787 = vpop.f32.mrb[0].mxu0
      %v788 = vpop.f32.mrb[0].mxu0
      %v789 = vadd.f32 0.0, %v788
      %v790 = vpop.f32.mrb[0].mxu0
      %791 = vmatprep.mubr.bf16.mxu0 0
      %792 = vmatmul.mubr.bf16.gmra.mrb[0].mxu0 %v682
      %v793 = vpop.f32.mrb[0].mxu0
      %v794 = vadd.f32 0.0, %v793
      %v795 = vpop.f32.mrb[0].mxu0
      %v796 = vpop.f32.mrb[0].mxu0
      %v797 = vadd.f32 0.0, %v796
      %v798 = vpop.f32.mrb[0].mxu0
      %799 = vdwg.mxu0
      %v800 = vadd.f32 %v626, %v770
      %v801 = vadd.f32 %v629, %v773
      %v802 = vadd.f32 %v634, %v778
      %v803 = vadd.f32 %v637, %v781
      %v804 = vadd.f32 %v642, %v786
      %v805 = vadd.f32 %v645, %v789
      %v806 = vadd.f32 %v650, %v794
      %v807 = vadd.f32 %v653, %v797
      %v808 = vld [vmem:[%s287] sm:$0x1]
      %v810 = vlaneseq
      %v811 = vshrl.u32 %v810, 7
      %v812 = vsub.s32 0, %v811
      %v813 = vrot.slane %v808, %v812
      %v815 = vadd.f32 %v800, %v813
      %v816 = vadd.f32 %v801, %v813
      %v817 = vadd.f32 %v802, %v813
      %v818 = vadd.f32 %v803, %v813
      %v819 = vadd.f32 %v804, %v813
      %v820 = vadd.f32 %v805, %v813
      %v821 = vadd.f32 %v806, %v813
      %v822 = vadd.f32 %v807, %v813
      %v823 = vlaneseq
      %v824 = vshrl.u32 %v823, 7
      %v825 = vadd.s32 %v824, 8
      %v826 = vadd.s32 %v824, 16
      %v827 = vadd.s32 %v824, 24
      %v828 = vadd.s32 %v824, 32
      %v829 = vadd.s32 %v824, 40
      %v830 = vadd.s32 %v824, 48
      %v831 = vadd.s32 %v824, 56
      %v832 = vstv %s315
      %v833 = vadd.s32 %v832, %v824
      %v834 = vadd.s32 %v832, %v825
      %v835 = vadd.s32 %v832, %v826
      %v836 = vadd.s32 %v832, %v827
      %v837 = vadd.s32 %v832, %v828
      %v838 = vadd.s32 %v832, %v829
      %v839 = vadd.s32 %v832, %v830
      %v840 = vadd.s32 %v832, %v831
      %vm841 = vcmp.lt.s32.totalorder %v833, 50
      %vm842 = vcmp.lt.s32.totalorder %v834, 50
      %vm843 = vcmp.lt.s32.totalorder %v835, 50
      %vm844 = vcmp.lt.s32.totalorder %v836, 50
      %vm845 = vcmp.lt.s32.totalorder %v837, 50
      %vm846 = vcmp.lt.s32.totalorder %v838, 50
      %vm847 = vcmp.lt.s32.totalorder %v839, 50
      %vm848 = vcmp.lt.s32.totalorder %v840, 50
      %v849 = vsel %vm841, 1, 0
      %v850 = vsel %vm842, 1, 0
      %v851 = vsel %vm843, 1, 0
      %v852 = vsel %vm844, 1, 0
      %v853 = vsel %vm845, 1, 0
      %v854 = vsel %vm846, 1, 0
      %v855 = vsel %vm847, 1, 0
      %v856 = vsel %vm848, 1, 0
      %vm857 = vcmp.eq.s32.totalorder %v849, 1
      %vm858 = vcmp.eq.s32.totalorder %v850, 1
      %vm859 = vcmp.eq.s32.totalorder %v851, 1
      %vm860 = vcmp.eq.s32.totalorder %v852, 1
      %vm861 = vcmp.eq.s32.totalorder %v853, 1
      %vm862 = vcmp.eq.s32.totalorder %v854, 1
      %vm863 = vcmp.eq.s32.totalorder %v855, 1
      %vm864 = vcmp.eq.s32.totalorder %v856, 1
      %v865 = vsel %vm857, %v815, 0.0
      %v866 = vsel %vm858, %v816, 0.0
      %v867 = vsel %vm859, %v817, 0.0
      %v868 = vsel %vm860, %v818, 0.0
      %v869 = vsel %vm861, %v819, 0.0
      %v870 = vsel %vm862, %v820, 0.0
      %v871 = vsel %vm863, %v821, 0.0
      %v872 = vsel %vm864, %v822, 0.0
      %v873 = vld [vmem:[%s299] sm:$0xff]
      %v874 = vld [vmem:[%s299 + $0x8] sm:$0xff]
      %v875 = vld [vmem:[%s299 + $0x10] sm:$0xff]
      %v876 = vld [vmem:[%s299 + $0x18] sm:$0xff]
      %v877 = vld [vmem:[%s299 + $0x20] sm:$0xff]
      %v878 = vld [vmem:[%s299 + $0x28] sm:$0xff]
      %v879 = vld [vmem:[%s299 + $0x30] sm:$0xff]
      %v880 = vld [vmem:[%s299 + $0x38] sm:$0xff]
      %v881 = vadd.f32 %v865, %v873
      %v882 = vadd.f32 %v866, %v874
      %v883 = vadd.f32 %v867, %v875
      %v884 = vadd.f32 %v868, %v876
      %v885 = vadd.f32 %v869, %v877
      %v886 = vadd.f32 %v870, %v878
      %v887 = vadd.f32 %v871, %v879
      %v888 = vadd.f32 %v872, %v880
      %889 = vst [vmem:[%s312] sm:$0xff] %v881
      %890 = vst [vmem:[%s312 + $0x8] sm:$0xff] %v882
      %891 = vst [vmem:[%s312 + $0x10] sm:$0xff] %v883
      %892 = vst [vmem:[%s312 + $0x18] sm:$0xff] %v884
      %893 = vst [vmem:[%s312 + $0x20] sm:$0xff] %v885
      %894 = vst [vmem:[%s312 + $0x28] sm:$0xff] %v886
      %895 = vst [vmem:[%s312 + $0x30] sm:$0xff] %v887
      %896 = vst [vmem:[%s312 + $0x38] sm:$0xff] %v888
      %s897 = smul.u32 8, %s21
      %p898 = scmp.lt.s32.totalorder %s20, 3
      %s899 = scalar_select %p898, %s20, 3
      %p900 = scmp.lt.s32.totalorder %s897, 7
      %s901 = scalar_select %p900, %s897, 7
      %p902 = scmp.lt.s32.totalorder %s22, 0
      %s903 = scalar_select %p902, %s22, 0
      %s904 = sadd.s32 %s903, %s901
      %s905 = smul.addr %s899, 8
      %s906 = sadd.s32 %s904, %s905
      %s907 = smul.addr %s906, 8
      %s908 = scalar_lea.vmem %s4, %s907
      // Predicated region
      $region37: #{residual_block1d_forward.3} parent=35 // pred_check
        %p909 = pneg %p164
      $region38: #{residual_block1d_forward.3} parent=35 // pred_check_branch
        %911 = sbr.rel (%p909) target = $region40
      $region39: #{residual_block1d_forward.3} parent=35 // pred_region
        %s912 = smul.u32 8, %s21
      $region40: #{residual_block1d_forward.3} parent=35 // pred_fallthru
        _
    $region36: #{residual_block1d_forward.3} parent=5 // pred_fallthru
      _
    %p913 = scmp.le.s32.totalorder 2, %s10
    // Predicated region
    $region41: #{residual_block1d_forward.3} parent=5 // pred_check
      %p914 = pneg %p913
    $region42: #{residual_block1d_forward.3} parent=5 // pred_check_branch
      %916 = sbr.rel (%p914) target = $region44
    $region43: #{residual_block1d_forward.3} parent=5 // pred_region
      %s917 = ssub.s32 %s10, 2
      // Predicated region
      $region45: #{residual_block1d_forward.3} parent=43 // pred_check
        %p918 = pneg %p170
      $region46: #{residual_block1d_forward.3} parent=43 // pred_check_branch
        %920 = sbr.rel (%p918) target = $region48
      $region47: #{residual_block1d_forward.3} parent=43 // pred_region
        %s921 = smul.u32 8, %s24
        %p922 = scmp.lt.s32.totalorder %s23, 3
        %s923 = scalar_select %p922, %s23, 3
        %p924 = scmp.lt.s32.totalorder %s921, 7
        %s925 = scalar_select %p924, %s921, 7
        %p926 = scmp.lt.s32.totalorder %s25, 0
        %s927 = scalar_select %p926, %s25, 0
        %s928 = sadd.s32 %s927, %s925
        %s929 = smul.addr %s923, 8
        %s930 = sadd.s32 %s928, %s929
        %s931 = smul.addr %s930, 8
        %s932 = scalar_lea.vmem %s4, %s931
      $region48: #{residual_block1d_forward.3} parent=43 // pred_fallthru
        _
    $region44: #{residual_block1d_forward.3} parent=5 // pred_fallthru
      _
  $region6: #{residual_block1d_forward.3} parent=0 // loop_footer
    %s14 = sadd.s32 1, %s10
  $region7: #{residual_block1d_forward.3} parent=0 // loop_footer_branch
    %9 = sbr.rel target = $region3
  $region8: #{residual_block1d_forward.3} parent=0 // loop_exit
    _

</llo_original>
